<compile_context>
chip_gen: v6e
topology: v6e:2x2x1
jax: 0.10.0
libtpu: 0.0.40
codegen_flags: <defaults>
</compile_context>

<pallas_src>
import jax
import jax.numpy as jnp
from jax.experimental import pallas as pl
from jax.experimental.pallas import tpu as pltpu


# ---------------------------------------------------------------------------
# Pallas kernel (single invocation, grid=(1,))
# ---------------------------------------------------------------------------
def _genmodel_kernel(
    x_ref,      # (T*B, IN)   time-major-flattened input
    wih_ref,    # (IN, 4H)    LSTM input weights, pre-transposed
    whh_ref,    # (H, 4H)     LSTM recurrent weights, pre-transposed
    b_ref,      # (1, 4H)     b_ih + b_hh
    h0_ref,     # (B, H)
    c0_ref,     # (B, H)
    w1_ref,     # (T*H, H1)   hidden Linear weight^T (full)
    b1_ref,     # (1, H1)
    w2_ref,     # (1, H1)     output projection weight (row layout)
    b2_ref,     # (1, 1)
    out_ref,    # (B, 1)
    hn_ref,     # (B, H)
    cn_ref,     # (B, H)
):
    B, H = h0_ref.shape
    H1 = b1_ref.shape[1]
    T = x_ref.shape[0] // B

    # ---- Hoisted input projection: one M=T*B MXU matmul, bias folded in. ----
    xw = (
        jnp.dot(x_ref[...], wih_ref[...], preferred_element_type=jnp.float32)
        + b_ref[...]
    )  # (T*B, 4H)

    whh = whh_ref[...]   # (H, 4H)
    w1 = w1_ref[...]     # (T*H, H1)

    # Lane mask selecting the candidate gate g (PyTorch order [i, f, g, o]).
    # Hoisted: tanh(x) = 2*sigmoid(2x) - 1 on g lanes, sigmoid elsewhere,
    # so each step needs only ONE full-width EUP activation pass.
    lane = jax.lax.broadcasted_iota(jnp.int32, (B, 4 * H), 1)
    is_g = (lane >= 2 * H) & (lane < 3 * H)
    pre_scale = jnp.where(is_g, 2.0, 1.0).astype(jnp.float32)   # (B, 4H)
    post_mul = jnp.where(is_g, 2.0, 1.0).astype(jnp.float32)
    post_add = jnp.where(is_g, -1.0, 0.0).astype(jnp.float32)

    h = h0_ref[...].astype(jnp.float32)
    c = c0_ref[...].astype(jnp.float32)
    # Fold b1 into the accumulator init (saves an epilogue add).
    acc = jnp.broadcast_to(b1_ref[...], (B, H1)).astype(jnp.float32)

    # Statically unrolled recurrence (T is small); all indices are static.
    for t in range(T):
        gates = xw[t * B:(t + 1) * B, :] + jnp.dot(
            h, whh, preferred_element_type=jnp.float32
        )  # (B, 4H)

        # Single EUP pass: sigmoid of pre-scaled gates, then affine fix-up on
        # the g lanes (VPU select), equivalent to [sigmoid, sigmoid, tanh, sigmoid].
        s = jax.nn.sigmoid(gates * pre_scale)
        act = s * post_mul + post_add

        i_g = act[:, 0 * H:1 * H]
        f_g = act[:, 1 * H:2 * H]
        g_g = act[:, 2 * H:3 * H]
        o_g = act[:, 3 * H:4 * H]

        c = f_g * c + i_g * g_g
        h = o_g * jnp.tanh(c)

        # Flatten(B, T*H) @ W1^T decomposed as sum over t of h_t @ W1^T[t*H:(t+1)*H]
        acc = acc + jnp.dot(
            h, w1[t * H:(t + 1) * H, :], preferred_element_type=jnp.float32
        )

    # Hidden layer: Linear (bias already in acc) -> Dropout(identity, eval) -> ReLU
    v = jnp.maximum(acc, 0.0)                                     # (B, H1)
    # Output projection on the VPU (avoid degenerate N=1 MXU matmul).
    out = jnp.sum(v * w2_ref[...], axis=-1, keepdims=True) + b2_ref[...]

    out_ref[...] = out.astype(out_ref.dtype)
    hn_ref[...] = h.astype(hn_ref.dtype)
    cn_ref[...] = c.astype(cn_ref.dtype)


def genmodel_forward(x, hidden, params):
    """x: (B, T, IN) batch_first; hidden = (h0, c0) each (1, B, H).

    Returns (out (B, 1), (h_n (1, B, H), c_n (1, B, H))).
    """
    B, T, IN = x.shape
    H = params["whh_t"].shape[0]
    H1 = params["w1_t"].shape[1]

    # Wrapper-side layout plumbing: batch_first -> time-major, flattened.
    x_flat = jnp.transpose(x, (1, 0, 2)).reshape(T * B, IN)
    h0 = hidden[0][0]   # (B, H)
    c0 = hidden[1][0]   # (B, H)

    grid_spec = pltpu.PrefetchScalarGridSpec(
        num_scalar_prefetch=0,
        grid=(1,),
        in_specs=[
            pl.BlockSpec((T * B, IN), lambda i: (0, 0)),    # x (flattened)
            pl.BlockSpec((IN, 4 * H), lambda i: (0, 0)),     # W_ih^T
            pl.BlockSpec((H, 4 * H), lambda i: (0, 0)),      # W_hh^T
            pl.BlockSpec((1, 4 * H), lambda i: (0, 0)),      # b_ih + b_hh
            pl.BlockSpec((B, H), lambda i: (0, 0)),          # h0
            pl.BlockSpec((B, H), lambda i: (0, 0)),          # c0
            pl.BlockSpec((T * H, H1), lambda i: (0, 0)),     # W1^T (full)
            pl.BlockSpec((1, H1), lambda i: (0, 0)),         # b1
            pl.BlockSpec((1, H1), lambda i: (0, 0)),         # W2 (row)
            pl.BlockSpec((1, 1), lambda i: (0, 0)),          # b2
        ],
        out_specs=[
            pl.BlockSpec((B, 1), lambda i: (0, 0)),          # out
            pl.BlockSpec((B, H), lambda i: (0, 0)),          # h_n
            pl.BlockSpec((B, H), lambda i: (0, 0)),          # c_n
        ],
        scratch_shapes=[],
    )

    out, h_n, c_n = pl.pallas_call(
        _genmodel_kernel,
        grid_spec=grid_spec,
        out_shape=(
            jax.ShapeDtypeStruct((B, 1), jnp.float32),
            jax.ShapeDtypeStruct((B, H), jnp.float32),
            jax.ShapeDtypeStruct((B, H), jnp.float32),
        ),
        compiler_params=pltpu.CompilerParams(
            dimension_semantics=("arbitrary",)
        ),
    )(
        x_flat,
        params["wih_t"], params["whh_t"], params["b"],
        h0, c0,
        params["w1_t"], params["b1"],
        params["w2"], params["b2"],
    )
    return out, (h_n[None], c_n[None])


# ---------------------------------------------------------------------------
# Pure-JAX reference (for correctness check)
# ---------------------------------------------------------------------------
def genmodel_reference(x, hidden, params):
    B, T, IN = x.shape

    def step(carry, x_t):
        h, c = carry
        gates = x_t @ params["wih_t"] + h @ params["whh_t"] + params["b"]
        i, f, g, o = jnp.split(gates, 4, axis=-1)
        i = jax.nn.sigmoid(i)
        f = jax.nn.sigmoid(f)
        g = jnp.tanh(g)
        o = jax.nn.sigmoid(o)
        c = f * c + i * g
        h = o * jnp.tanh(c)
        return (h, c), h

    (h_n, c_n), hs = jax.lax.scan(step, (hidden[0][0], hidden[1][0]),
                                  jnp.transpose(x, (1, 0, 2)))
    val = jnp.transpose(hs, (1, 0, 2)).reshape(B, -1)       # (B, T*H)
    v = jnp.maximum(val @ params["w1_t"] + params["b1"], 0.0)
    out = v @ params["w2"].T + params["b2"]
    return out, (h_n[None], c_n[None])


# ---------------------------------------------------------------------------
# Deterministic parameter init (shapes from GenModel.__init__)
# ---------------------------------------------------------------------------
def init_params(key, input_size, hidden_dim, seq_length, hidden1):
    H = hidden_dim
    keys = jax.random.split(key, 8)
    s_lstm = 1.0 / jnp.sqrt(H)
    s_l1 = 1.0 / jnp.sqrt(H * seq_length)
    s_l2 = 1.0 / jnp.sqrt(hidden1)

    wih = jax.random.uniform(keys[0], (4 * H, input_size), jnp.float32, -s_lstm, s_lstm)
    whh = jax.random.uniform(keys[1], (4 * H, H), jnp.float32, -s_lstm, s_lstm)
    b_ih = jax.random.uniform(keys[2], (4 * H,), jnp.float32, -s_lstm, s_lstm)
    b_hh = jax.random.uniform(keys[3], (4 * H,), jnp.float32, -s_lstm, s_lstm)

    w1 = jax.random.uniform(keys[4], (hidden1, H * seq_length), jnp.float32, -s_l1, s_l1)
    b1 = jax.random.uniform(keys[5], (hidden1,), jnp.float32, -s_l1, s_l1)
    w2 = jax.random.uniform(keys[6], (1, hidden1), jnp.float32, -s_l2, s_l2)
    b2 = jax.random.uniform(keys[7], (1,), jnp.float32, -s_l2, s_l2)

    return {
        "wih_t": wih.T,                    # (IN, 4H)
        "whh_t": whh.T,                    # (H, 4H)
        "b": (b_ih + b_hh)[None, :],       # (1, 4H)
        "w1_t": w1.T,                      # (T*H, H1)
        "b1": b1[None, :],                 # (1, H1)
        "w2": w2,                          # (1, H1)  row layout for VPU dot
        "b2": b2[None, :],                 # (1, 1)
    }


if __name__ == "__main__":
    # GenModel(hidden_dim=[32, 16], seq_length=8, n_layers=1,
    #          hidden_layers=1, bidirectional=False)
    INPUT_SIZE = 856
    HIDDEN = 32
    HIDDEN1 = 16
    SEQ = 8
    BATCH = 2

    key = jax.random.PRNGKey(0)
    k_param, k_x = jax.random.split(key)
    params = init_params(k_param, INPUT_SIZE, HIDDEN, SEQ, HIDDEN1)

    x = jax.random.normal(k_x, (BATCH, SEQ, INPUT_SIZE), jnp.float32)
    # init_hidden(batch_size): zeros of shape (n_layers * D, B, H)
    h0 = jnp.zeros((1, BATCH, HIDDEN), jnp.float32)
    c0 = jnp.zeros((1, BATCH, HIDDEN), jnp.float32)

    out, (h_n, c_n) = genmodel_forward(x, (h0, c0), params)
    jax.block_until_ready((out, h_n, c_n))

    ref_out, (ref_h, ref_c) = genmodel_reference(x, (h0, c0), params)
    assert jnp.allclose(out, ref_out, atol=1e-4, rtol=1e-4)
    assert jnp.allclose(h_n, ref_h, atol=1e-4, rtol=1e-4)
    assert jnp.allclose(c_n, ref_c, atol=1e-4, rtol=1e-4)

    print("KERNEL_OK")
</pallas_src>

<mosaic_0001>
module attributes {stable_mosaic.version = 11 : i64} {
  func.func @_genmodel_kernel(%arg0: i32, %arg1: memref<16x856xf32, #tpu.memory_space<vmem>>, %arg2: memref<856x128xf32, #tpu.memory_space<vmem>>, %arg3: memref<32x128xf32, #tpu.memory_space<vmem>>, %arg4: memref<1x128xf32, #tpu.memory_space<vmem>>, %arg5: memref<2x32xf32, #tpu.memory_space<vmem>>, %arg6: memref<2x32xf32, #tpu.memory_space<vmem>>, %arg7: memref<256x16xf32, #tpu.memory_space<vmem>>, %arg8: memref<1x16xf32, #tpu.memory_space<vmem>>, %arg9: memref<1x16xf32, #tpu.memory_space<vmem>>, %arg10: memref<1x1xf32, #tpu.memory_space<vmem>>, %arg11: memref<2x1xf32, #tpu.memory_space<vmem>>, %arg12: memref<2x32xf32, #tpu.memory_space<vmem>>, %arg13: memref<2x32xf32, #tpu.memory_space<vmem>>) attributes {dimension_semantics = [#tpu.dimension_semantics<arbitrary>], iteration_bounds = array<i64: 1>, scalar_prefetch = 0 : i64, scratch_operands = 0 : i64, tpu.core_type = #tpu.core_type<tc>, window_params = [{pipeline_mode = #tpu.pipeline_mode<synchronous>, transform_indices = @transform_0, window_bounds = array<i64: 16, 856>}, {pipeline_mode = #tpu.pipeline_mode<synchronous>, transform_indices = @transform_1, window_bounds = array<i64: 856, 128>}, {pipeline_mode = #tpu.pipeline_mode<synchronous>, transform_indices = @transform_2, window_bounds = array<i64: 32, 128>}, {pipeline_mode = #tpu.pipeline_mode<synchronous>, transform_indices = @transform_3, window_bounds = array<i64: 1, 128>}, {pipeline_mode = #tpu.pipeline_mode<synchronous>, transform_indices = @transform_4, window_bounds = array<i64: 2, 32>}, {pipeline_mode = #tpu.pipeline_mode<synchronous>, transform_indices = @transform_5, window_bounds = array<i64: 2, 32>}, {pipeline_mode = #tpu.pipeline_mode<synchronous>, transform_indices = @transform_6, window_bounds = array<i64: 256, 16>}, {pipeline_mode = #tpu.pipeline_mode<synchronous>, transform_indices = @transform_7, window_bounds = array<i64: 1, 16>}, {pipeline_mode = #tpu.pipeline_mode<synchronous>, transform_indices = @transform_8, window_bounds = array<i64: 1, 16>}, {pipeline_mode = #tpu.pipeline_mode<synchronous>, transform_indices = @transform_9, window_bounds = array<i64: 1, 1>}, {pipeline_mode = #tpu.pipeline_mode<synchronous>, transform_indices = @transform_10, window_bounds = array<i64: 2, 1>}, {pipeline_mode = #tpu.pipeline_mode<synchronous>, transform_indices = @transform_11, window_bounds = array<i64: 2, 32>}, {pipeline_mode = #tpu.pipeline_mode<synchronous>, transform_indices = @transform_12, window_bounds = array<i64: 2, 32>}]} {
    %c0 = arith.constant 0 : index
    %c0_0 = arith.constant 0 : index
    %0 = vector.load %arg1[%c0, %c0_0] : memref<16x856xf32, #tpu.memory_space<vmem>>, vector<16x856xf32>
    %c0_1 = arith.constant 0 : index
    %c0_2 = arith.constant 0 : index
    %1 = vector.load %arg2[%c0_1, %c0_2] : memref<856x128xf32, #tpu.memory_space<vmem>>, vector<856x128xf32>
    %cst = arith.constant dense<0.000000e+00> : vector<16x128xf32>
    %2 = tpu.matmul %0, %1, %cst {dimension_numbers = #tpu.dot_dimension_numbers<[1], [0], [0], [1], [0, 0, 1, 1], [], []>} : vector<16x856xf32>, vector<856x128xf32>, vector<16x128xf32> -> vector<16x128xf32>
    %c0_3 = arith.constant 0 : index
    %c0_4 = arith.constant 0 : index
    %3 = vector.load %arg4[%c0_3, %c0_4] : memref<1x128xf32, #tpu.memory_space<vmem>>, vector<1x128xf32>
    %4 = vector.broadcast %3 : vector<1x128xf32> to vector<16x128xf32>
    %5 = arith.addf %2, %4 : vector<16x128xf32>
    %c0_5 = arith.constant 0 : index
    %c0_6 = arith.constant 0 : index
    %6 = vector.load %arg3[%c0_5, %c0_6] : memref<32x128xf32, #tpu.memory_space<vmem>>, vector<32x128xf32>
    %c0_7 = arith.constant 0 : index
    %c0_8 = arith.constant 0 : index
    %7 = vector.load %arg7[%c0_7, %c0_8] : memref<256x16xf32, #tpu.memory_space<vmem>>, vector<256x16xf32>
    %8 = tpu.iota {dimensions = array<i32: 1>} : vector<2x128xi32>
    %c64_i32 = arith.constant 64 : i32
    %9 = vector.broadcast %c64_i32 : i32 to vector<2x128xi32>
    %10 = arith.cmpi sge, %8, %9 : vector<2x128xi32>
    %c96_i32 = arith.constant 96 : i32
    %11 = vector.broadcast %c96_i32 : i32 to vector<2x128xi32>
    %12 = arith.cmpi slt, %8, %11 : vector<2x128xi32>
    %13 = arith.andi %10, %12 : vector<2x128xi1>
    %cst_9 = arith.constant 2.000000e+00 : f32
    %cst_10 = arith.constant 1.000000e+00 : f32
    %14 = vector.broadcast %cst_9 : f32 to vector<2x128xf32>
    %15 = vector.broadcast %cst_10 : f32 to vector<2x128xf32>
    %16 = arith.select %13, %14, %15 : vector<2x128xi1>, vector<2x128xf32>
    %cst_11 = arith.constant 2.000000e+00 : f32
    %cst_12 = arith.constant 1.000000e+00 : f32
    %17 = vector.broadcast %cst_11 : f32 to vector<2x128xf32>
    %18 = vector.broadcast %cst_12 : f32 to vector<2x128xf32>
    %19 = arith.select %13, %17, %18 : vector<2x128xi1>, vector<2x128xf32>
    %cst_13 = arith.constant -1.000000e+00 : f32
    %cst_14 = arith.constant 0.000000e+00 : f32
    %20 = vector.broadcast %cst_13 : f32 to vector<2x128xf32>
    %21 = vector.broadcast %cst_14 : f32 to vector<2x128xf32>
    %22 = arith.select %13, %20, %21 : vector<2x128xi1>, vector<2x128xf32>
    %c0_15 = arith.constant 0 : index
    %c0_16 = arith.constant 0 : index
    %23 = vector.load %arg5[%c0_15, %c0_16] : memref<2x32xf32, #tpu.memory_space<vmem>>, vector<2x32xf32>
    %c0_17 = arith.constant 0 : index
    %c0_18 = arith.constant 0 : index
    %24 = vector.load %arg6[%c0_17, %c0_18] : memref<2x32xf32, #tpu.memory_space<vmem>>, vector<2x32xf32>
    %c0_19 = arith.constant 0 : index
    %c0_20 = arith.constant 0 : index
    %25 = vector.load %arg8[%c0_19, %c0_20] : memref<1x16xf32, #tpu.memory_space<vmem>>, vector<1x16xf32>
    %26 = vector.shape_cast %25 : vector<1x16xf32> to vector<1x16xf32>
    %27 = vector.broadcast %26 : vector<1x16xf32> to vector<2x16xf32>
    %28 = vector.extract_strided_slice %5 {offsets = [0, 0], sizes = [2, 128], strides = [1, 1]} : vector<16x128xf32> to vector<2x128xf32>
    %cst_21 = arith.constant dense<0.000000e+00> : vector<2x128xf32>
    %29 = tpu.matmul %23, %6, %cst_21 {dimension_numbers = #tpu.dot_dimension_numbers<[1], [0], [0], [1], [0, 0, 1, 1], [], []>} : vector<2x32xf32>, vector<32x128xf32>, vector<2x128xf32> -> vector<2x128xf32>
    %30 = arith.addf %28, %29 : vector<2x128xf32>
    %31 = arith.mulf %30, %16 : vector<2x128xf32>
    %32 = arith.negf %31 : vector<2x128xf32>
    %33 = math.exp %32 : vector<2x128xf32>
    %cst_22 = arith.constant 1.000000e+00 : f32
    %34 = vector.broadcast %cst_22 : f32 to vector<2x128xf32>
    %35 = arith.addf %34, %33 : vector<2x128xf32>
    %36 = arith.divf %34, %35 : vector<2x128xf32>
    %37 = arith.mulf %36, %19 : vector<2x128xf32>
    %38 = arith.addf %37, %22 : vector<2x128xf32>
    %39 = vector.extract_strided_slice %38 {offsets = [0, 0], sizes = [2, 32], strides = [1, 1]} : vector<2x128xf32> to vector<2x32xf32>
    %40 = vector.extract_strided_slice %38 {offsets = [0, 32], sizes = [2, 32], strides = [1, 1]} : vector<2x128xf32> to vector<2x32xf32>
    %41 = vector.extract_strided_slice %38 {offsets = [0, 64], sizes = [2, 32], strides = [1, 1]} : vector<2x128xf32> to vector<2x32xf32>
    %42 = vector.extract_strided_slice %38 {offsets = [0, 96], sizes = [2, 32], strides = [1, 1]} : vector<2x128xf32> to vector<2x32xf32>
    %43 = arith.mulf %40, %24 : vector<2x32xf32>
    %44 = arith.mulf %39, %41 : vector<2x32xf32>
    %45 = arith.addf %43, %44 : vector<2x32xf32>
    %46 = math.tanh %45 : vector<2x32xf32>
    %47 = arith.mulf %42, %46 : vector<2x32xf32>
    %48 = vector.extract_strided_slice %7 {offsets = [0, 0], sizes = [32, 16], strides = [1, 1]} : vector<256x16xf32> to vector<32x16xf32>
    %cst_23 = arith.constant dense<0.000000e+00> : vector<2x16xf32>
    %49 = tpu.matmul %47, %48, %cst_23 {dimension_numbers = #tpu.dot_dimension_numbers<[1], [0], [0], [1], [0, 0, 1, 1], [], []>} : vector<2x32xf32>, vector<32x16xf32>, vector<2x16xf32> -> vector<2x16xf32>
    %50 = arith.addf %27, %49 : vector<2x16xf32>
    %51 = vector.extract_strided_slice %5 {offsets = [2, 0], sizes = [2, 128], strides = [1, 1]} : vector<16x128xf32> to vector<2x128xf32>
    %cst_24 = arith.constant dense<0.000000e+00> : vector<2x128xf32>
    %52 = tpu.matmul %47, %6, %cst_24 {dimension_numbers = #tpu.dot_dimension_numbers<[1], [0], [0], [1], [0, 0, 1, 1], [], []>} : vector<2x32xf32>, vector<32x128xf32>, vector<2x128xf32> -> vector<2x128xf32>
    %53 = arith.addf %51, %52 : vector<2x128xf32>
    %54 = arith.mulf %53, %16 : vector<2x128xf32>
    %55 = arith.negf %54 : vector<2x128xf32>
    %56 = math.exp %55 : vector<2x128xf32>
    %cst_25 = arith.constant 1.000000e+00 : f32
    %57 = vector.broadcast %cst_25 : f32 to vector<2x128xf32>
    %58 = arith.addf %57, %56 : vector<2x128xf32>
    %59 = arith.divf %57, %58 : vector<2x128xf32>
    %60 = arith.mulf %59, %19 : vector<2x128xf32>
    %61 = arith.addf %60, %22 : vector<2x128xf32>
    %62 = vector.extract_strided_slice %61 {offsets = [0, 0], sizes = [2, 32], strides = [1, 1]} : vector<2x128xf32> to vector<2x32xf32>
    %63 = vector.extract_strided_slice %61 {offsets = [0, 32], sizes = [2, 32], strides = [1, 1]} : vector<2x128xf32> to vector<2x32xf32>
    %64 = vector.extract_strided_slice %61 {offsets = [0, 64], sizes = [2, 32], strides = [1, 1]} : vector<2x128xf32> to vector<2x32xf32>
    %65 = vector.extract_strided_slice %61 {offsets = [0, 96], sizes = [2, 32], strides = [1, 1]} : vector<2x128xf32> to vector<2x32xf32>
    %66 = arith.mulf %63, %45 : vector<2x32xf32>
    %67 = arith.mulf %62, %64 : vector<2x32xf32>
    %68 = arith.addf %66, %67 : vector<2x32xf32>
    %69 = math.tanh %68 : vector<2x32xf32>
    %70 = arith.mulf %65, %69 : vector<2x32xf32>
    %71 = vector.extract_strided_slice %7 {offsets = [32, 0], sizes = [32, 16], strides = [1, 1]} : vector<256x16xf32> to vector<32x16xf32>
    %cst_26 = arith.constant dense<0.000000e+00> : vector<2x16xf32>
    %72 = tpu.matmul %70, %71, %cst_26 {dimension_numbers = #tpu.dot_dimension_numbers<[1], [0], [0], [1], [0, 0, 1, 1], [], []>} : vector<2x32xf32>, vector<32x16xf32>, vector<2x16xf32> -> vector<2x16xf32>
    %73 = arith.addf %50, %72 : vector<2x16xf32>
    %74 = vector.extract_strided_slice %5 {offsets = [4, 0], sizes = [2, 128], strides = [1, 1]} : vector<16x128xf32> to vector<2x128xf32>
    %cst_27 = arith.constant dense<0.000000e+00> : vector<2x128xf32>
    %75 = tpu.matmul %70, %6, %cst_27 {dimension_numbers = #tpu.dot_dimension_numbers<[1], [0], [0], [1], [0, 0, 1, 1], [], []>} : vector<2x32xf32>, vector<32x128xf32>, vector<2x128xf32> -> vector<2x128xf32>
    %76 = arith.addf %74, %75 : vector<2x128xf32>
    %77 = arith.mulf %76, %16 : vector<2x128xf32>
    %78 = arith.negf %77 : vector<2x128xf32>
    %79 = math.exp %78 : vector<2x128xf32>
    %cst_28 = arith.constant 1.000000e+00 : f32
    %80 = vector.broadcast %cst_28 : f32 to vector<2x128xf32>
    %81 = arith.addf %80, %79 : vector<2x128xf32>
    %82 = arith.divf %80, %81 : vector<2x128xf32>
    %83 = arith.mulf %82, %19 : vector<2x128xf32>
    %84 = arith.addf %83, %22 : vector<2x128xf32>
    %85 = vector.extract_strided_slice %84 {offsets = [0, 0], sizes = [2, 32], strides = [1, 1]} : vector<2x128xf32> to vector<2x32xf32>
    %86 = vector.extract_strided_slice %84 {offsets = [0, 32], sizes = [2, 32], strides = [1, 1]} : vector<2x128xf32> to vector<2x32xf32>
    %87 = vector.extract_strided_slice %84 {offsets = [0, 64], sizes = [2, 32], strides = [1, 1]} : vector<2x128xf32> to vector<2x32xf32>
    %88 = vector.extract_strided_slice %84 {offsets = [0, 96], sizes = [2, 32], strides = [1, 1]} : vector<2x128xf32> to vector<2x32xf32>
    %89 = arith.mulf %86, %68 : vector<2x32xf32>
    %90 = arith.mulf %85, %87 : vector<2x32xf32>
    %91 = arith.addf %89, %90 : vector<2x32xf32>
    %92 = math.tanh %91 : vector<2x32xf32>
    %93 = arith.mulf %88, %92 : vector<2x32xf32>
    %94 = vector.extract_strided_slice %7 {offsets = [64, 0], sizes = [32, 16], strides = [1, 1]} : vector<256x16xf32> to vector<32x16xf32>
    %cst_29 = arith.constant dense<0.000000e+00> : vector<2x16xf32>
    %95 = tpu.matmul %93, %94, %cst_29 {dimension_numbers = #tpu.dot_dimension_numbers<[1], [0], [0], [1], [0, 0, 1, 1], [], []>} : vector<2x32xf32>, vector<32x16xf32>, vector<2x16xf32> -> vector<2x16xf32>
    %96 = arith.addf %73, %95 : vector<2x16xf32>
    %97 = vector.extract_strided_slice %5 {offsets = [6, 0], sizes = [2, 128], strides = [1, 1]} : vector<16x128xf32> to vector<2x128xf32>
    %cst_30 = arith.constant dense<0.000000e+00> : vector<2x128xf32>
    %98 = tpu.matmul %93, %6, %cst_30 {dimension_numbers = #tpu.dot_dimension_numbers<[1], [0], [0], [1], [0, 0, 1, 1], [], []>} : vector<2x32xf32>, vector<32x128xf32>, vector<2x128xf32> -> vector<2x128xf32>
    %99 = arith.addf %97, %98 : vector<2x128xf32>
    %100 = arith.mulf %99, %16 : vector<2x128xf32>
    %101 = arith.negf %100 : vector<2x128xf32>
    %102 = math.exp %101 : vector<2x128xf32>
    %cst_31 = arith.constant 1.000000e+00 : f32
    %103 = vector.broadcast %cst_31 : f32 to vector<2x128xf32>
    %104 = arith.addf %103, %102 : vector<2x128xf32>
    %105 = arith.divf %103, %104 : vector<2x128xf32>
    %106 = arith.mulf %105, %19 : vector<2x128xf32>
    %107 = arith.addf %106, %22 : vector<2x128xf32>
    %108 = vector.extract_strided_slice %107 {offsets = [0, 0], sizes = [2, 32], strides = [1, 1]} : vector<2x128xf32> to vector<2x32xf32>
    %109 = vector.extract_strided_slice %107 {offsets = [0, 32], sizes = [2, 32], strides = [1, 1]} : vector<2x128xf32> to vector<2x32xf32>
    %110 = vector.extract_strided_slice %107 {offsets = [0, 64], sizes = [2, 32], strides = [1, 1]} : vector<2x128xf32> to vector<2x32xf32>
    %111 = vector.extract_strided_slice %107 {offsets = [0, 96], sizes = [2, 32], strides = [1, 1]} : vector<2x128xf32> to vector<2x32xf32>
    %112 = arith.mulf %109, %91 : vector<2x32xf32>
    %113 = arith.mulf %108, %110 : vector<2x32xf32>
    %114 = arith.addf %112, %113 : vector<2x32xf32>
    %115 = math.tanh %114 : vector<2x32xf32>
    %116 = arith.mulf %111, %115 : vector<2x32xf32>
    %117 = vector.extract_strided_slice %7 {offsets = [96, 0], sizes = [32, 16], strides = [1, 1]} : vector<256x16xf32> to vector<32x16xf32>
    %cst_32 = arith.constant dense<0.000000e+00> : vector<2x16xf32>
    %118 = tpu.matmul %116, %117, %cst_32 {dimension_numbers = #tpu.dot_dimension_numbers<[1], [0], [0], [1], [0, 0, 1, 1], [], []>} : vector<2x32xf32>, vector<32x16xf32>, vector<2x16xf32> -> vector<2x16xf32>
    %119 = arith.addf %96, %118 : vector<2x16xf32>
    %120 = vector.extract_strided_slice %5 {offsets = [8, 0], sizes = [2, 128], strides = [1, 1]} : vector<16x128xf32> to vector<2x128xf32>
    %cst_33 = arith.constant dense<0.000000e+00> : vector<2x128xf32>
    %121 = tpu.matmul %116, %6, %cst_33 {dimension_numbers = #tpu.dot_dimension_numbers<[1], [0], [0], [1], [0, 0, 1, 1], [], []>} : vector<2x32xf32>, vector<32x128xf32>, vector<2x128xf32> -> vector<2x128xf32>
    %122 = arith.addf %120, %121 : vector<2x128xf32>
    %123 = arith.mulf %122, %16 : vector<2x128xf32>
    %124 = arith.negf %123 : vector<2x128xf32>
    %125 = math.exp %124 : vector<2x128xf32>
    %cst_34 = arith.constant 1.000000e+00 : f32
    %126 = vector.broadcast %cst_34 : f32 to vector<2x128xf32>
    %127 = arith.addf %126, %125 : vector<2x128xf32>
    %128 = arith.divf %126, %127 : vector<2x128xf32>
    %129 = arith.mulf %128, %19 : vector<2x128xf32>
    %130 = arith.addf %129, %22 : vector<2x128xf32>
    %131 = vector.extract_strided_slice %130 {offsets = [0, 0], sizes = [2, 32], strides = [1, 1]} : vector<2x128xf32> to vector<2x32xf32>
    %132 = vector.extract_strided_slice %130 {offsets = [0, 32], sizes = [2, 32], strides = [1, 1]} : vector<2x128xf32> to vector<2x32xf32>
    %133 = vector.extract_strided_slice %130 {offsets = [0, 64], sizes = [2, 32], strides = [1, 1]} : vector<2x128xf32> to vector<2x32xf32>
    %134 = vector.extract_strided_slice %130 {offsets = [0, 96], sizes = [2, 32], strides = [1, 1]} : vector<2x128xf32> to vector<2x32xf32>
    %135 = arith.mulf %132, %114 : vector<2x32xf32>
    %136 = arith.mulf %131, %133 : vector<2x32xf32>
    %137 = arith.addf %135, %136 : vector<2x32xf32>
    %138 = math.tanh %137 : vector<2x32xf32>
    %139 = arith.mulf %134, %138 : vector<2x32xf32>
    %140 = vector.extract_strided_slice %7 {offsets = [128, 0], sizes = [32, 16], strides = [1, 1]} : vector<256x16xf32> to vector<32x16xf32>
    %cst_35 = arith.constant dense<0.000000e+00> : vector<2x16xf32>
    %141 = tpu.matmul %139, %140, %cst_35 {dimension_numbers = #tpu.dot_dimension_numbers<[1], [0], [0], [1], [0, 0, 1, 1], [], []>} : vector<2x32xf32>, vector<32x16xf32>, vector<2x16xf32> -> vector<2x16xf32>
    %142 = arith.addf %119, %141 : vector<2x16xf32>
    %143 = vector.extract_strided_slice %5 {offsets = [10, 0], sizes = [2, 128], strides = [1, 1]} : vector<16x128xf32> to vector<2x128xf32>
    %cst_36 = arith.constant dense<0.000000e+00> : vector<2x128xf32>
    %144 = tpu.matmul %139, %6, %cst_36 {dimension_numbers = #tpu.dot_dimension_numbers<[1], [0], [0], [1], [0, 0, 1, 1], [], []>} : vector<2x32xf32>, vector<32x128xf32>, vector<2x128xf32> -> vector<2x128xf32>
    %145 = arith.addf %143, %144 : vector<2x128xf32>
    %146 = arith.mulf %145, %16 : vector<2x128xf32>
    %147 = arith.negf %146 : vector<2x128xf32>
    %148 = math.exp %147 : vector<2x128xf32>
    %cst_37 = arith.constant 1.000000e+00 : f32
    %149 = vector.broadcast %cst_37 : f32 to vector<2x128xf32>
    %150 = arith.addf %149, %148 : vector<2x128xf32>
    %151 = arith.divf %149, %150 : vector<2x128xf32>
    %152 = arith.mulf %151, %19 : vector<2x128xf32>
    %153 = arith.addf %152, %22 : vector<2x128xf32>
    %154 = vector.extract_strided_slice %153 {offsets = [0, 0], sizes = [2, 32], strides = [1, 1]} : vector<2x128xf32> to vector<2x32xf32>
    %155 = vector.extract_strided_slice %153 {offsets = [0, 32], sizes = [2, 32], strides = [1, 1]} : vector<2x128xf32> to vector<2x32xf32>
    %156 = vector.extract_strided_slice %153 {offsets = [0, 64], sizes = [2, 32], strides = [1, 1]} : vector<2x128xf32> to vector<2x32xf32>
    %157 = vector.extract_strided_slice %153 {offsets = [0, 96], sizes = [2, 32], strides = [1, 1]} : vector<2x128xf32> to vector<2x32xf32>
    %158 = arith.mulf %155, %137 : vector<2x32xf32>
    %159 = arith.mulf %154, %156 : vector<2x32xf32>
    %160 = arith.addf %158, %159 : vector<2x32xf32>
    %161 = math.tanh %160 : vector<2x32xf32>
    %162 = arith.mulf %157, %161 : vector<2x32xf32>
    %163 = vector.extract_strided_slice %7 {offsets = [160, 0], sizes = [32, 16], strides = [1, 1]} : vector<256x16xf32> to vector<32x16xf32>
    %cst_38 = arith.constant dense<0.000000e+00> : vector<2x16xf32>
    %164 = tpu.matmul %162, %163, %cst_38 {dimension_numbers = #tpu.dot_dimension_numbers<[1], [0], [0], [1], [0, 0, 1, 1], [], []>} : vector<2x32xf32>, vector<32x16xf32>, vector<2x16xf32> -> vector<2x16xf32>
    %165 = arith.addf %142, %164 : vector<2x16xf32>
    %166 = vector.extract_strided_slice %5 {offsets = [12, 0], sizes = [2, 128], strides = [1, 1]} : vector<16x128xf32> to vector<2x128xf32>
    %cst_39 = arith.constant dense<0.000000e+00> : vector<2x128xf32>
    %167 = tpu.matmul %162, %6, %cst_39 {dimension_numbers = #tpu.dot_dimension_numbers<[1], [0], [0], [1], [0, 0, 1, 1], [], []>} : vector<2x32xf32>, vector<32x128xf32>, vector<2x128xf32> -> vector<2x128xf32>
    %168 = arith.addf %166, %167 : vector<2x128xf32>
    %169 = arith.mulf %168, %16 : vector<2x128xf32>
    %170 = arith.negf %169 : vector<2x128xf32>
    %171 = math.exp %170 : vector<2x128xf32>
    %cst_40 = arith.constant 1.000000e+00 : f32
    %172 = vector.broadcast %cst_40 : f32 to vector<2x128xf32>
    %173 = arith.addf %172, %171 : vector<2x128xf32>
    %174 = arith.divf %172, %173 : vector<2x128xf32>
    %175 = arith.mulf %174, %19 : vector<2x128xf32>
    %176 = arith.addf %175, %22 : vector<2x128xf32>
    %177 = vector.extract_strided_slice %176 {offsets = [0, 0], sizes = [2, 32], strides = [1, 1]} : vector<2x128xf32> to vector<2x32xf32>
    %178 = vector.extract_strided_slice %176 {offsets = [0, 32], sizes = [2, 32], strides = [1, 1]} : vector<2x128xf32> to vector<2x32xf32>
    %179 = vector.extract_strided_slice %176 {offsets = [0, 64], sizes = [2, 32], strides = [1, 1]} : vector<2x128xf32> to vector<2x32xf32>
    %180 = vector.extract_strided_slice %176 {offsets = [0, 96], sizes = [2, 32], strides = [1, 1]} : vector<2x128xf32> to vector<2x32xf32>
    %181 = arith.mulf %178, %160 : vector<2x32xf32>
    %182 = arith.mulf %177, %179 : vector<2x32xf32>
    %183 = arith.addf %181, %182 : vector<2x32xf32>
    %184 = math.tanh %183 : vector<2x32xf32>
    %185 = arith.mulf %180, %184 : vector<2x32xf32>
    %186 = vector.extract_strided_slice %7 {offsets = [192, 0], sizes = [32, 16], strides = [1, 1]} : vector<256x16xf32> to vector<32x16xf32>
    %cst_41 = arith.constant dense<0.000000e+00> : vector<2x16xf32>
    %187 = tpu.matmul %185, %186, %cst_41 {dimension_numbers = #tpu.dot_dimension_numbers<[1], [0], [0], [1], [0, 0, 1, 1], [], []>} : vector<2x32xf32>, vector<32x16xf32>, vector<2x16xf32> -> vector<2x16xf32>
    %188 = arith.addf %165, %187 : vector<2x16xf32>
    %189 = vector.extract_strided_slice %5 {offsets = [14, 0], sizes = [2, 128], strides = [1, 1]} : vector<16x128xf32> to vector<2x128xf32>
    %cst_42 = arith.constant dense<0.000000e+00> : vector<2x128xf32>
    %190 = tpu.matmul %185, %6, %cst_42 {dimension_numbers = #tpu.dot_dimension_numbers<[1], [0], [0], [1], [0, 0, 1, 1], [], []>} : vector<2x32xf32>, vector<32x128xf32>, vector<2x128xf32> -> vector<2x128xf32>
    %191 = arith.addf %189, %190 : vector<2x128xf32>
    %192 = arith.mulf %191, %16 : vector<2x128xf32>
    %193 = arith.negf %192 : vector<2x128xf32>
    %194 = math.exp %193 : vector<2x128xf32>
    %cst_43 = arith.constant 1.000000e+00 : f32
    %195 = vector.broadcast %cst_43 : f32 to vector<2x128xf32>
    %196 = arith.addf %195, %194 : vector<2x128xf32>
    %197 = arith.divf %195, %196 : vector<2x128xf32>
    %198 = arith.mulf %197, %19 : vector<2x128xf32>
    %199 = arith.addf %198, %22 : vector<2x128xf32>
    %200 = vector.extract_strided_slice %199 {offsets = [0, 0], sizes = [2, 32], strides = [1, 1]} : vector<2x128xf32> to vector<2x32xf32>
    %201 = vector.extract_strided_slice %199 {offsets = [0, 32], sizes = [2, 32], strides = [1, 1]} : vector<2x128xf32> to vector<2x32xf32>
    %202 = vector.extract_strided_slice %199 {offsets = [0, 64], sizes = [2, 32], strides = [1, 1]} : vector<2x128xf32> to vector<2x32xf32>
    %203 = vector.extract_strided_slice %199 {offsets = [0, 96], sizes = [2, 32], strides = [1, 1]} : vector<2x128xf32> to vector<2x32xf32>
    %204 = arith.mulf %201, %183 : vector<2x32xf32>
    %205 = arith.mulf %200, %202 : vector<2x32xf32>
    %206 = arith.addf %204, %205 : vector<2x32xf32>
    %207 = math.tanh %206 : vector<2x32xf32>
    %208 = arith.mulf %203, %207 : vector<2x32xf32>
    %209 = vector.extract_strided_slice %7 {offsets = [224, 0], sizes = [32, 16], strides = [1, 1]} : vector<256x16xf32> to vector<32x16xf32>
    %cst_44 = arith.constant dense<0.000000e+00> : vector<2x16xf32>
    %210 = tpu.matmul %208, %209, %cst_44 {dimension_numbers = #tpu.dot_dimension_numbers<[1], [0], [0], [1], [0, 0, 1, 1], [], []>} : vector<2x32xf32>, vector<32x16xf32>, vector<2x16xf32> -> vector<2x16xf32>
    %211 = arith.addf %188, %210 : vector<2x16xf32>
    %cst_45 = arith.constant 0.000000e+00 : f32
    %212 = vector.broadcast %cst_45 : f32 to vector<2x16xf32>
    %213 = arith.maximumf %211, %212 : vector<2x16xf32>
    %c0_46 = arith.constant 0 : index
    %c0_47 = arith.constant 0 : index
    %214 = vector.load %arg9[%c0_46, %c0_47] : memref<1x16xf32, #tpu.memory_space<vmem>>, vector<1x16xf32>
    %215 = vector.broadcast %214 : vector<1x16xf32> to vector<2x16xf32>
    %216 = arith.mulf %213, %215 : vector<2x16xf32>
    %cst_48 = arith.constant dense<0.000000e+00> : vector<2xf32>
    %217 = vector.multi_reduction <add>, %216, %cst_48 [1] : vector<2x16xf32> to vector<2xf32>
    %218 = vector.shape_cast %217 : vector<2xf32> to vector<2x1xf32>
    %c0_49 = arith.constant 0 : index
    %c0_50 = arith.constant 0 : index
    %219 = vector.load %arg10[%c0_49, %c0_50] : memref<1x1xf32, #tpu.memory_space<vmem>>, vector<1x1xf32>
    %220 = vector.broadcast %219 : vector<1x1xf32> to vector<2x1xf32>
    %221 = arith.addf %218, %220 : vector<2x1xf32>
    %c0_51 = arith.constant 0 : index
    %c0_52 = arith.constant 0 : index
    %222 = vector.load %arg11[%c0_51, %c0_52] : memref<2x1xf32, #tpu.memory_space<vmem>>, vector<2x1xf32>
    tpu.vector_store %arg11[%c0_51, %c0_52], %221 {strides = array<i32>} : memref<2x1xf32, #tpu.memory_space<vmem>>, vector<2x1xf32>,
    %c0_53 = arith.constant 0 : index
    %c0_54 = arith.constant 0 : index
    %223 = vector.load %arg12[%c0_53, %c0_54] : memref<2x32xf32, #tpu.memory_space<vmem>>, vector<2x32xf32>
    tpu.vector_store %arg12[%c0_53, %c0_54], %208 {strides = array<i32>} : memref<2x32xf32, #tpu.memory_space<vmem>>, vector<2x32xf32>,
    %c0_55 = arith.constant 0 : index
    %c0_56 = arith.constant 0 : index
    %224 = vector.load %arg13[%c0_55, %c0_56] : memref<2x32xf32, #tpu.memory_space<vmem>>, vector<2x32xf32>
    tpu.vector_store %arg13[%c0_55, %c0_56], %206 {strides = array<i32>} : memref<2x32xf32, #tpu.memory_space<vmem>>, vector<2x32xf32>,
    return
  }
  func.func @transform_0(%arg0: i32) -> (i32, i32) {
    %c0_i32 = arith.constant 0 : i32
    %c0_i32_0 = arith.constant 0 : i32
    %c0_i32_1 = arith.constant 0 : i32
    return %c0_i32, %c0_i32_0 : i32, i32
  }
  func.func @transform_1(%arg0: i32) -> (i32, i32) {
    %c0_i32 = arith.constant 0 : i32
    %c0_i32_0 = arith.constant 0 : i32
    %c0_i32_1 = arith.constant 0 : i32
    return %c0_i32, %c0_i32_0 : i32, i32
  }
  func.func @transform_2(%arg0: i32) -> (i32, i32) {
    %c0_i32 = arith.constant 0 : i32
    %c0_i32_0 = arith.constant 0 : i32
    %c0_i32_1 = arith.constant 0 : i32
    return %c0_i32, %c0_i32_0 : i32, i32
  }
  func.func @transform_3(%arg0: i32) -> (i32, i32) {
    %c0_i32 = arith.constant 0 : i32
    %c0_i32_0 = arith.constant 0 : i32
    %c0_i32_1 = arith.constant 0 : i32
    return %c0_i32, %c0_i32_0 : i32, i32
  }
  func.func @transform_4(%arg0: i32) -> (i32, i32) {
    %c0_i32 = arith.constant 0 : i32
    %c0_i32_0 = arith.constant 0 : i32
    %c0_i32_1 = arith.constant 0 : i32
    return %c0_i32, %c0_i32_0 : i32, i32
  }
  func.func @transform_5(%arg0: i32) -> (i32, i32) {
    %c0_i32 = arith.constant 0 : i32
    %c0_i32_0 = arith.constant 0 : i32
    %c0_i32_1 = arith.constant 0 : i32
    return %c0_i32, %c0_i32_0 : i32, i32
  }
  func.func @transform_6(%arg0: i32) -> (i32, i32) {
    %c0_i32 = arith.constant 0 : i32
    %c0_i32_0 = arith.constant 0 : i32
    %c0_i32_1 = arith.constant 0 : i32
    return %c0_i32, %c0_i32_0 : i32, i32
  }
  func.func @transform_7(%arg0: i32) -> (i32, i32) {
    %c0_i32 = arith.constant 0 : i32
    %c0_i32_0 = arith.constant 0 : i32
    %c0_i32_1 = arith.constant 0 : i32
    return %c0_i32, %c0_i32_0 : i32, i32
  }
  func.func @transform_8(%arg0: i32) -> (i32, i32) {
    %c0_i32 = arith.constant 0 : i32
    %c0_i32_0 = arith.constant 0 : i32
    %c0_i32_1 = arith.constant 0 : i32
    return %c0_i32, %c0_i32_0 : i32, i32
  }
  func.func @transform_9(%arg0: i32) -> (i32, i32) {
    %c0_i32 = arith.constant 0 : i32
    %c0_i32_0 = arith.constant 0 : i32
    %c0_i32_1 = arith.constant 0 : i32
    return %c0_i32, %c0_i32_0 : i32, i32
  }
  func.func @transform_10(%arg0: i32) -> (i32, i32) {
    %c0_i32 = arith.constant 0 : i32
    %c0_i32_0 = arith.constant 0 : i32
    %c0_i32_1 = arith.constant 0 : i32
    return %c0_i32, %c0_i32_0 : i32, i32
  }
  func.func @transform_11(%arg0: i32) -> (i32, i32) {
    %c0_i32 = arith.constant 0 : i32
    %c0_i32_0 = arith.constant 0 : i32
    %c0_i32_1 = arith.constant 0 : i32
    return %c0_i32, %c0_i32_0 : i32, i32
  }
  func.func @transform_12(%arg0: i32) -> (i32, i32) {
    %c0_i32 = arith.constant 0 : i32
    %c0_i32_0 = arith.constant 0 : i32
    %c0_i32_1 = arith.constant 0 : i32
    return %c0_i32, %c0_i32_0 : i32, i32
  }
}

</mosaic_0001>

<llo_original>
// kernel: tpu_custom_call.1
$region0: #{tpu_custom_call.1}
  #allocation0 [shape = 'u32[]', space=smem, size = 0x4, offset = 0x4, fixed_abs, tag = 'smem constant byte address 0x4 - core index']
  #allocation1 [shape = 'u32[144,128]{1,0:T(1,128)}', space=vmem, size = 0x12000, scoped, tag = 'internal scratch']
  #allocation2 [shape = 'f32[1,1]{1,0:T(1,128)S(1)}', space=vmem, size = 0x200, scoped, tag = 'scoped memory for tpu_custom_call.1']
  %s0 = inlined_call_operand.vmem [shape: f32[16,856], index: 0, kind: input, shape index: {}]
  %s1 = inlined_call_operand.hbm [shape: f32[856,128], index: 1, kind: input, shape index: {}]
  %s2 = inlined_call_operand.vmem [shape: f32[32,128], index: 2, kind: input, shape index: {}]
  %s3 = inlined_call_operand.vmem [shape: f32[1,128], index: 3, kind: input, shape index: {}]
  %s4 = inlined_call_operand.vmem [shape: f32[2,32], index: 4, kind: input, shape index: {}]
  %s5 = inlined_call_operand.vmem [shape: f32[2,32], index: 5, kind: input, shape index: {}]
  %s6 = inlined_call_operand.vmem [shape: f32[256,16], index: 6, kind: input, shape index: {}]
  %s7 = inlined_call_operand.vmem [shape: f32[1,16], index: 7, kind: input, shape index: {}]
  %s8 = inlined_call_operand.vmem [shape: f32[1,16], index: 8, kind: input, shape index: {}]
  %s9 = inlined_call_operand.<no memory space> [shape: f32[1,1], index: 9, kind: input, shape index: {}]
  %s10 = inlined_call_operand.vmem [shape: f32[2,1], index: 10, kind: output, shape index: {0}]
  %s11 = inlined_call_operand.hbm [shape: f32[2,32], index: 11, kind: output, shape index: {1}]
  %s12 = inlined_call_operand.hbm [shape: f32[2,32], index: 12, kind: output, shape index: {2}]
  %13 = xla_tuple %s10, %s11, %s12
  %s14 = sld [smem:[#allocation0]]
  $region70: #{tpu_custom_call.1} parent=0
    _
  %s16 = ssub.s32 1, %s14
  %s17 = scalar_select 0, %s16, %s14
  %v18 = vstv %s9
  %19 = vst [vmem:[#allocation2] sm:$0x1] %v18
  $region1: #{tpu_custom_call.1} parent=0
    #allocation3 [shape = 'u8[438272]{0}', space=vmem, size = 0x6b000, scoped, tag = 'input window, operand 1, single buffered']
    #allocation4 [shape = 's32[1]{0}', space=sflag, size = 0x4, scoped, tag = 'scoped memory for tpu_custom_call.1']
    #allocation5 [shape = 's32[1]{0}', space=sflag, size = 0x4, scoped, tag = 'scoped memory for tpu_custom_call.1']
    #allocation6 [shape = 'u8[1024]{0}', space=vmem, size = 0x400, scoped, tag = 'output window, operand 1, single buffered']
    #allocation7 [shape = 'u8[1024]{0}', space=vmem, size = 0x400, scoped, tag = 'output window, operand 2, single buffered']
    #allocation8 [shape = 's32[1]{0}', space=sflag, size = 0x4, scoped, tag = 'scoped memory for tpu_custom_call.1']
    %20 = vsyncpa [#allocation4], 0
    %21 = vsyncpa [#allocation5], 0
    %22 = vsyncpa [#allocation8], 0
    // Predicated region
    $region2: #{tpu_custom_call.1} parent=1 // pred_check
      _
    $region3: #{tpu_custom_call.1} parent=1 // pred_check_branch
      %24 = sbr.rel (0) target = $region5
    $region4: #{tpu_custom_call.1} parent=1 // pred_region
      _
    $region5: #{tpu_custom_call.1} parent=1 // pred_fallthru
      _
    // Predicated region
    $region6: #{tpu_custom_call.1} parent=1 // pred_check
      _
    $region7: #{tpu_custom_call.1} parent=1 // pred_check_branch
      %26 = sbr.rel (0) target = $region9
    $region8: #{tpu_custom_call.1} parent=1 // pred_region
      %s28 = ssub.s32 13696, 13696
      %29 = vsyncadd [#allocation4], %s28
      %s30 = sshll.u32 [#allocation3], 4
      %s31 = int_to_ptr.vmem [resolvable:$true] %s30
      %36 = dma.hbm_to_vmem [thread:$0]  %s1, 13696, %s31, [#allocation4], 128, 128, 8
    $region9: #{tpu_custom_call.1} parent=1 // pred_fallthru
      _
    // Predicated region
    $region10: #{tpu_custom_call.1} parent=1 // pred_check
      _
    $region11: #{tpu_custom_call.1} parent=1 // pred_check_branch
      %38 = sbr.rel (0) target = $region13
    $region12: #{tpu_custom_call.1} parent=1 // pred_region
      _
    $region13: #{tpu_custom_call.1} parent=1 // pred_fallthru
      _
    // Predicated region
    $region14: #{tpu_custom_call.1} parent=1 // pred_check
      _
    $region15: #{tpu_custom_call.1} parent=1 // pred_check_branch
      %40 = sbr.rel (0) target = $region17
    $region16: #{tpu_custom_call.1} parent=1 // pred_region
      _
    $region17: #{tpu_custom_call.1} parent=1 // pred_fallthru
      _
    // Predicated region
    $region18: #{tpu_custom_call.1} parent=1 // pred_check
      _
    $region19: #{tpu_custom_call.1} parent=1 // pred_check_branch
      %42 = sbr.rel (0) target = $region21
    $region20: #{tpu_custom_call.1} parent=1 // pred_region
      _
    $region21: #{tpu_custom_call.1} parent=1 // pred_fallthru
      _
    // Predicated region
    $region22: #{tpu_custom_call.1} parent=1 // pred_check
      _
    $region23: #{tpu_custom_call.1} parent=1 // pred_check_branch
      %44 = sbr.rel (0) target = $region25
    $region24: #{tpu_custom_call.1} parent=1 // pred_region
      _
    $region25: #{tpu_custom_call.1} parent=1 // pred_fallthru
      _
    // Predicated region
    $region26: #{tpu_custom_call.1} parent=1 // pred_check
      _
    $region27: #{tpu_custom_call.1} parent=1 // pred_check_branch
      %46 = sbr.rel (0) target = $region29
    $region28: #{tpu_custom_call.1} parent=1 // pred_region
      _
    $region29: #{tpu_custom_call.1} parent=1 // pred_fallthru
      _
    // Predicated region
    $region30: #{tpu_custom_call.1} parent=1 // pred_check
      _
    $region31: #{tpu_custom_call.1} parent=1 // pred_check_branch
      %48 = sbr.rel (0) target = $region33
    $region32: #{tpu_custom_call.1} parent=1 // pred_region
      _
    $region33: #{tpu_custom_call.1} parent=1 // pred_fallthru
      _
    // Predicated region
    $region34: #{tpu_custom_call.1} parent=1 // pred_check
      _
    $region35: #{tpu_custom_call.1} parent=1 // pred_check_branch
      %50 = sbr.rel (0) target = $region37
    $region36: #{tpu_custom_call.1} parent=1 // pred_region
      _
    $region37: #{tpu_custom_call.1} parent=1 // pred_fallthru
      _
    // Predicated region
    $region38: #{tpu_custom_call.1} parent=1 // pred_check
      _
    $region39: #{tpu_custom_call.1} parent=1 // pred_check_branch
      %52 = sbr.rel (0) target = $region41
    $region40: #{tpu_custom_call.1} parent=1 // pred_region
      _
    $region41: #{tpu_custom_call.1} parent=1 // pred_fallthru
      _
    // Predicated region
    $region42: #{tpu_custom_call.1} parent=1 // pred_check
      _
    $region43: #{tpu_custom_call.1} parent=1 // pred_check_branch
      %54 = sbr.rel (0) target = $region45
    $region44: #{tpu_custom_call.1} parent=1 // pred_region
      %55 = dma.done [#allocation4], 13696
    $region45: #{tpu_custom_call.1} parent=1 // pred_fallthru
      _
    %v56 = vld [vmem:[%s0] sm:$0xff]
    %v57 = vld [vmem:[%s0 + $0x8] sm:$0xff]
    %v58 = vld [vmem:[%s0 + $0x10] sm:$0xff]
    %v59 = vld [vmem:[%s0 + $0x18] sm:$0xff]
    %v60 = vld [vmem:[%s0 + $0x20] sm:$0xff]
    %v61 = vld [vmem:[%s0 + $0x28] sm:$0xff]
    %v62 = vld [vmem:[%s0 + $0x30] sm:$0xff]
    %v63 = vld [vmem:[%s0 + $0x38] sm:$0xff]
    %v64 = vld [vmem:[%s0 + $0x40] sm:$0xff]
    %v65 = vld [vmem:[%s0 + $0x48] sm:$0xff]
    %v66 = vld [vmem:[%s0 + $0x50] sm:$0xff]
    %v67 = vld [vmem:[%s0 + $0x58] sm:$0xff]
    %v68 = vld [vmem:[%s0 + $0x60] sm:$0xff]
    %v69 = vld [vmem:[%s0 + $0x68] sm:$0xff]
    %v70 = vld [vmem:[#allocation3] sm:$0xff]
    %v71 = vld [vmem:[#allocation3 + $0x8] sm:$0xff]
    %v72 = vld [vmem:[#allocation3 + $0x10] sm:$0xff]
    %v73 = vld [vmem:[#allocation3 + $0x18] sm:$0xff]
    %v74 = vld [vmem:[#allocation3 + $0x20] sm:$0xff]
    %v75 = vld [vmem:[#allocation3 + $0x28] sm:$0xff]
    %v76 = vld [vmem:[#allocation3 + $0x30] sm:$0xff]
    %v77 = vld [vmem:[#allocation3 + $0x38] sm:$0xff]
    %v78 = vld [vmem:[#allocation3 + $0x40] sm:$0xff]
    %v79 = vld [vmem:[#allocation3 + $0x48] sm:$0xff]
    %v80 = vld [vmem:[#allocation3 + $0x50] sm:$0xff]
    %v81 = vld [vmem:[#allocation3 + $0x58] sm:$0xff]
    %v82 = vld [vmem:[#allocation3 + $0x60] sm:$0xff]
    %v83 = vld [vmem:[#allocation3 + $0x68] sm:$0xff]
    %v84 = vld [vmem:[#allocation3 + $0x70] sm:$0xff]
    %v85 = vld [vmem:[#allocation3 + $0x78] sm:$0xff]
    %v86 = vld [vmem:[#allocation3 + $0x80] sm:$0xff]
    %v87 = vld [vmem:[#allocation3 + $0x88] sm:$0xff]
    %v88 = vld [vmem:[#allocation3 + $0x90] sm:$0xff]
    %v89 = vld [vmem:[#allocation3 + $0x98] sm:$0xff]
    %v90 = vld [vmem:[#allocation3 + $0xa0] sm:$0xff]
    %v91 = vld [vmem:[#allocation3 + $0xa8] sm:$0xff]
    %v92 = vld [vmem:[#allocation3 + $0xb0] sm:$0xff]
    %v93 = vld [vmem:[#allocation3 + $0xb8] sm:$0xff]
    %v94 = vld [vmem:[#allocation3 + $0xc0] sm:$0xff]
    %v95 = vld [vmem:[#allocation3 + $0xc8] sm:$0xff]
    %v96 = vld [vmem:[#allocation3 + $0xd0] sm:$0xff]
    %v97 = vld [vmem:[#allocation3 + $0xd8] sm:$0xff]
    %v98 = vld [vmem:[#allocation3 + $0xe0] sm:$0xff]
    %v99 = vld [vmem:[#allocation3 + $0xe8] sm:$0xff]
    %v100 = vld [vmem:[#allocation3 + $0xf0] sm:$0xff]
    %v101 = vld [vmem:[#allocation3 + $0xf8] sm:$0xff]
    %v102 = vld [vmem:[#allocation3 + $0x100] sm:$0xff]
    %v103 = vld [vmem:[#allocation3 + $0x108] sm:$0xff]
    %v104 = vld [vmem:[#allocation3 + $0x110] sm:$0xff]
    %v105 = vld [vmem:[#allocation3 + $0x118] sm:$0xff]
    %v106 = vld [vmem:[#allocation3 + $0x120] sm:$0xff]
    %v107 = vld [vmem:[#allocation3 + $0x128] sm:$0xff]
    %v108 = vld [vmem:[#allocation3 + $0x130] sm:$0xff]
    %v109 = vld [vmem:[#allocation3 + $0x138] sm:$0xff]
    %v110 = vld [vmem:[#allocation3 + $0x140] sm:$0xff]
    %v111 = vld [vmem:[#allocation3 + $0x148] sm:$0xff]
    %v112 = vld [vmem:[#allocation3 + $0x150] sm:$0xff]
    %v113 = vld [vmem:[#allocation3 + $0x158] sm:$0xff]
    %v114 = vld [vmem:[#allocation3 + $0x160] sm:$0xff]
    %v115 = vld [vmem:[#allocation3 + $0x168] sm:$0xff]
    %v116 = vld [vmem:[#allocation3 + $0x170] sm:$0xff]
    %v117 = vld [vmem:[#allocation3 + $0x178] sm:$0xff]
    %v118 = vld [vmem:[#allocation3 + $0x180] sm:$0xff]
    %v119 = vld [vmem:[#allocation3 + $0x188] sm:$0xff]
    %v120 = vld [vmem:[#allocation3 + $0x190] sm:$0xff]
    %v121 = vld [vmem:[#allocation3 + $0x198] sm:$0xff]
    %v122 = vld [vmem:[#allocation3 + $0x1a0] sm:$0xff]
    %v123 = vld [vmem:[#allocation3 + $0x1a8] sm:$0xff]
    %v124 = vld [vmem:[#allocation3 + $0x1b0] sm:$0xff]
    %v125 = vld [vmem:[#allocation3 + $0x1b8] sm:$0xff]
    %v126 = vld [vmem:[#allocation3 + $0x1c0] sm:$0xff]
    %v127 = vld [vmem:[#allocation3 + $0x1c8] sm:$0xff]
    %v128 = vld [vmem:[#allocation3 + $0x1d0] sm:$0xff]
    %v129 = vld [vmem:[#allocation3 + $0x1d8] sm:$0xff]
    %v130 = vld [vmem:[#allocation3 + $0x1e0] sm:$0xff]
    %v131 = vld [vmem:[#allocation3 + $0x1e8] sm:$0xff]
    %v132 = vld [vmem:[#allocation3 + $0x1f0] sm:$0xff]
    %v133 = vld [vmem:[#allocation3 + $0x1f8] sm:$0xff]
    %v134 = vld [vmem:[#allocation3 + $0x200] sm:$0xff]
    %v135 = vld [vmem:[#allocation3 + $0x208] sm:$0xff]
    %v136 = vld [vmem:[#allocation3 + $0x210] sm:$0xff]
    %v137 = vld [vmem:[#allocation3 + $0x218] sm:$0xff]
    %v138 = vld [vmem:[#allocation3 + $0x220] sm:$0xff]
    %v139 = vld [vmem:[#allocation3 + $0x228] sm:$0xff]
    %v140 = vld [vmem:[#allocation3 + $0x230] sm:$0xff]
    %v141 = vld [vmem:[#allocation3 + $0x238] sm:$0xff]
    %v142 = vld [vmem:[#allocation3 + $0x240] sm:$0xff]
    %v143 = vld [vmem:[#allocation3 + $0x248] sm:$0xff]
    %v144 = vld [vmem:[#allocation3 + $0x250] sm:$0xff]
    %v145 = vld [vmem:[#allocation3 + $0x258] sm:$0xff]
    %v146 = vld [vmem:[#allocation3 + $0x260] sm:$0xff]
    %v147 = vld [vmem:[#allocation3 + $0x268] sm:$0xff]
    %v148 = vld [vmem:[#allocation3 + $0x270] sm:$0xff]
    %v149 = vld [vmem:[#allocation3 + $0x278] sm:$0xff]
    %v150 = vld [vmem:[#allocation3 + $0x280] sm:$0xff]
    %v151 = vld [vmem:[#allocation3 + $0x288] sm:$0xff]
    %v152 = vld [vmem:[#allocation3 + $0x290] sm:$0xff]
    %v153 = vld [vmem:[#allocation3 + $0x298] sm:$0xff]
    %v154 = vld [vmem:[#allocation3 + $0x2a0] sm:$0xff]
    %v155 = vld [vmem:[#allocation3 + $0x2a8] sm:$0xff]
    %v156 = vld [vmem:[#allocation3 + $0x2b0] sm:$0xff]
    %v157 = vld [vmem:[#allocation3 + $0x2b8] sm:$0xff]
    %v158 = vld [vmem:[#allocation3 + $0x2c0] sm:$0xff]
    %v159 = vld [vmem:[#allocation3 + $0x2c8] sm:$0xff]
    %v160 = vld [vmem:[#allocation3 + $0x2d0] sm:$0xff]
    %v161 = vld [vmem:[#allocation3 + $0x2d8] sm:$0xff]
    %v162 = vld [vmem:[#allocation3 + $0x2e0] sm:$0xff]
    %v163 = vld [vmem:[#allocation3 + $0x2e8] sm:$0xff]
    %v164 = vld [vmem:[#allocation3 + $0x2f0] sm:$0xff]
    %v165 = vld [vmem:[#allocation3 + $0x2f8] sm:$0xff]
    %v166 = vld [vmem:[#allocation3 + $0x300] sm:$0xff]
    %v167 = vld [vmem:[#allocation3 + $0x308] sm:$0xff]
    %v168 = vld [vmem:[#allocation3 + $0x310] sm:$0xff]
    %v169 = vld [vmem:[#allocation3 + $0x318] sm:$0xff]
    %v170 = vld [vmem:[#allocation3 + $0x320] sm:$0xff]
    %v171 = vld [vmem:[#allocation3 + $0x328] sm:$0xff]
    %v172 = vld [vmem:[#allocation3 + $0x330] sm:$0xff]
    %v173 = vld [vmem:[#allocation3 + $0x338] sm:$0xff]
    %v174 = vld [vmem:[#allocation3 + $0x340] sm:$0xff]
    %v175 = vld [vmem:[#allocation3 + $0x348] sm:$0xff]
    %v176 = vld [vmem:[#allocation3 + $0x350] sm:$0xff]
    %v177 = vld [vmem:[%s3] sm:$0x1]
    %v179 = vlaneseq
    %v180 = vshrl.u32 %v179, 7
    %v181 = vsub.s32 0, %v180
    %v182 = vrot.slane %v177, %v181
    %vm184 = vcmask 719872
    %v186 = vsel %vm184, %v62, 0
    %v189 = vsel %vm184, %v69, 0
    %191 = vmatprep.subr.mxu0 0.0
    %192 = vmatpush1.msra.mxu0 %v85
    %193 = vmatprep.subr.mxu0 0.0
    %194 = vmatpush1.msra.mxu0 %v84
    %195 = vmatprep.subr.mxu0 0.0
    %196 = vmatpush1.msra.mxu0 %v83
    %197 = vmatprep.subr.mxu0 0.0
    %198 = vmatpush1.msra.mxu0 %v82
    %199 = vmatprep.subr.mxu0 0.0
    %200 = vmatpush1.msra.mxu0 %v81
    %201 = vmatprep.subr.mxu0 0.0
    %202 = vmatpush1.msra.mxu0 %v80
    %203 = vmatprep.subr.mxu0 0.0
    %204 = vmatpush1.msra.mxu0 %v79
    %205 = vmatprep.subr.mxu0 0.0
    %206 = vmatpush1.msra.mxu0 %v78
    %207 = vmatprep.subr.mxu0 0.0
    %208 = vmatpush1.msra.mxu0 %v77
    %209 = vmatprep.subr.mxu0 0.0
    %210 = vmatpush1.msra.mxu0 %v76
    %211 = vmatprep.subr.mxu0 0.0
    %212 = vmatpush1.msra.mxu0 %v75
    %213 = vmatprep.subr.mxu0 0.0
    %214 = vmatpush1.msra.mxu0 %v74
    %215 = vmatprep.subr.mxu0 0.0
    %216 = vmatpush1.msra.mxu0 %v73
    %217 = vmatprep.subr.mxu0 0.0
    %218 = vmatpush1.msra.mxu0 %v72
    %219 = vmatprep.subr.mxu0 0.0
    %220 = vmatpush1.msra.mxu0 %v71
    %221 = vmatprep.subr.mxu0 0.0
    %222 = vmatpush1.msra.mxu0 %v70
    %223 = vmatprep.subr.mxu0 0.0
    %224 = vmatpush2.msra.mxu0 %v101
    %225 = vmatprep.subr.mxu0 0.0
    %226 = vmatpush2.msra.mxu0 %v100
    %227 = vmatprep.subr.mxu0 0.0
    %228 = vmatpush2.msra.mxu0 %v99
    %229 = vmatprep.subr.mxu0 0.0
    %230 = vmatpush2.msra.mxu0 %v98
    %231 = vmatprep.subr.mxu0 0.0
    %232 = vmatpush2.msra.mxu0 %v97
    %233 = vmatprep.subr.mxu0 0.0
    %234 = vmatpush2.msra.mxu0 %v96
    %235 = vmatprep.subr.mxu0 0.0
    %236 = vmatpush2.msra.mxu0 %v95
    %237 = vmatprep.subr.mxu0 0.0
    %238 = vmatpush2.msra.mxu0 %v94
    %239 = vmatprep.subr.mxu0 0.0
    %240 = vmatpush2.msra.mxu0 %v93
    %241 = vmatprep.subr.mxu0 0.0
    %242 = vmatpush2.msra.mxu0 %v92
    %243 = vmatprep.subr.mxu0 0.0
    %244 = vmatpush2.msra.mxu0 %v91
    %245 = vmatprep.subr.mxu0 0.0
    %246 = vmatpush2.msra.mxu0 %v90
    %247 = vmatprep.subr.mxu0 0.0
    %248 = vmatpush2.msra.mxu0 %v89
    %249 = vmatprep.subr.mxu0 0.0
    %250 = vmatpush2.msra.mxu0 %v88
    %251 = vmatprep.subr.mxu0 0.0
    %252 = vmatpush2.msra.mxu0 %v87
    %253 = vmatprep.subr.mxu0 0.0
    %254 = vmatpush2.msra.mxu0 %v86
    %255 = vmatprep.mubr.f32.mxu0 %v57
    %256 = vmatmul.mubr.f32.gmra.mxu0 %v56
    %v257 = vpop.f32.mrf.mxu0
    %v258 = vadd.f32 %v182, %v257
    %v259 = vpop.f32.mrf.mxu0
    %260 = vmatprep.mubr.f32.mxu0 %v64
    %261 = vmatmul.mubr.f32.gmra.mxu0 %v63
    %v262 = vpop.f32.mrf.mxu0
    %v263 = vadd.f32 %v182, %v262
    %v264 = vpop.f32.mrf.mxu0
    %265 = vdwg.mxu0
    %266 = vmatprep.subr.mxu0 0.0
    %267 = vmatpush1.msra.mxu0 %v117
    %268 = vmatprep.subr.mxu0 0.0
    %269 = vmatpush1.msra.mxu0 %v116
    %270 = vmatprep.subr.mxu0 0.0
    %271 = vmatpush1.msra.mxu0 %v115
    %272 = vmatprep.subr.mxu0 0.0
    %273 = vmatpush1.msra.mxu0 %v114
    %274 = vmatprep.subr.mxu0 0.0
    %275 = vmatpush1.msra.mxu0 %v113
    %276 = vmatprep.subr.mxu0 0.0
    %277 = vmatpush1.msra.mxu0 %v112
    %278 = vmatprep.subr.mxu0 0.0
    %279 = vmatpush1.msra.mxu0 %v111
    %280 = vmatprep.subr.mxu0 0.0
    %281 = vmatpush1.msra.mxu0 %v110
    %282 = vmatprep.subr.mxu0 0.0
    %283 = vmatpush1.msra.mxu0 %v109
    %284 = vmatprep.subr.mxu0 0.0
    %285 = vmatpush1.msra.mxu0 %v108
    %286 = vmatprep.subr.mxu0 0.0
    %287 = vmatpush1.msra.mxu0 %v107
    %288 = vmatprep.subr.mxu0 0.0
    %289 = vmatpush1.msra.mxu0 %v106
    %290 = vmatprep.subr.mxu0 0.0
    %291 = vmatpush1.msra.mxu0 %v105
    %292 = vmatprep.subr.mxu0 0.0
    %293 = vmatpush1.msra.mxu0 %v104
    %294 = vmatprep.subr.mxu0 0.0
    %295 = vmatpush1.msra.mxu0 %v103
    %296 = vmatprep.subr.mxu0 0.0
    %297 = vmatpush1.msra.mxu0 %v102
    %298 = vmatprep.subr.mxu0 0.0
    %299 = vmatpush2.msra.mxu0 %v133
    %300 = vmatprep.subr.mxu0 0.0
    %301 = vmatpush2.msra.mxu0 %v132
    %302 = vmatprep.subr.mxu0 0.0
    %303 = vmatpush2.msra.mxu0 %v131
    %304 = vmatprep.subr.mxu0 0.0
    %305 = vmatpush2.msra.mxu0 %v130
    %306 = vmatprep.subr.mxu0 0.0
    %307 = vmatpush2.msra.mxu0 %v129
    %308 = vmatprep.subr.mxu0 0.0
    %309 = vmatpush2.msra.mxu0 %v128
    %310 = vmatprep.subr.mxu0 0.0
    %311 = vmatpush2.msra.mxu0 %v127
    %312 = vmatprep.subr.mxu0 0.0
    %313 = vmatpush2.msra.mxu0 %v126
    %314 = vmatprep.subr.mxu0 0.0
    %315 = vmatpush2.msra.mxu0 %v125
    %316 = vmatprep.subr.mxu0 0.0
    %317 = vmatpush2.msra.mxu0 %v124
    %318 = vmatprep.subr.mxu0 0.0
    %319 = vmatpush2.msra.mxu0 %v123
    %320 = vmatprep.subr.mxu0 0.0
    %321 = vmatpush2.msra.mxu0 %v122
    %322 = vmatprep.subr.mxu0 0.0
    %323 = vmatpush2.msra.mxu0 %v121
    %324 = vmatprep.subr.mxu0 0.0
    %325 = vmatpush2.msra.mxu0 %v120
    %326 = vmatprep.subr.mxu0 0.0
    %327 = vmatpush2.msra.mxu0 %v119
    %328 = vmatprep.subr.mxu0 0.0
    %329 = vmatpush2.msra.mxu0 %v118
    %330 = vmatprep.mubr.f32.mxu0 %v59
    %331 = vmatmul.mubr.f32.gmra.mxu0 %v58
    %v332 = vpop.f32.mrf.mxu0
    %v333 = vadd.f32 %v258, %v332
    %v334 = vpop.f32.mrf.mxu0
    %335 = vmatprep.mubr.f32.mxu0 %v66
    %336 = vmatmul.mubr.f32.gmra.mxu0 %v65
    %v337 = vpop.f32.mrf.mxu0
    %v338 = vadd.f32 %v263, %v337
    %v339 = vpop.f32.mrf.mxu0
    %340 = vdwg.mxu0
    %341 = vmatprep.subr.mxu0 0.0
    %342 = vmatpush1.msra.mxu0 %v149
    %343 = vmatprep.subr.mxu0 0.0
    %344 = vmatpush1.msra.mxu0 %v148
    %345 = vmatprep.subr.mxu0 0.0
    %346 = vmatpush1.msra.mxu0 %v147
    %347 = vmatprep.subr.mxu0 0.0
    %348 = vmatpush1.msra.mxu0 %v146
    %349 = vmatprep.subr.mxu0 0.0
    %350 = vmatpush1.msra.mxu0 %v145
    %351 = vmatprep.subr.mxu0 0.0
    %352 = vmatpush1.msra.mxu0 %v144
    %353 = vmatprep.subr.mxu0 0.0
    %354 = vmatpush1.msra.mxu0 %v143
    %355 = vmatprep.subr.mxu0 0.0
    %356 = vmatpush1.msra.mxu0 %v142
    %357 = vmatprep.subr.mxu0 0.0
    %358 = vmatpush1.msra.mxu0 %v141
    %359 = vmatprep.subr.mxu0 0.0
    %360 = vmatpush1.msra.mxu0 %v140
    %361 = vmatprep.subr.mxu0 0.0
    %362 = vmatpush1.msra.mxu0 %v139
    %363 = vmatprep.subr.mxu0 0.0
    %364 = vmatpush1.msra.mxu0 %v138
    %365 = vmatprep.subr.mxu0 0.0
    %366 = vmatpush1.msra.mxu0 %v137
    %367 = vmatprep.subr.mxu0 0.0
    %368 = vmatpush1.msra.mxu0 %v136
    %369 = vmatprep.subr.mxu0 0.0
    %370 = vmatpush1.msra.mxu0 %v135
    %371 = vmatprep.subr.mxu0 0.0
    %372 = vmatpush1.msra.mxu0 %v134
    %373 = vmatprep.subr.mxu0 0.0
    %374 = vmatpush2.msra.mxu0 %v165
    %375 = vmatprep.subr.mxu0 0.0
    %376 = vmatpush2.msra.mxu0 %v164
    %377 = vmatprep.subr.mxu0 0.0
    %378 = vmatpush2.msra.mxu0 %v163
    %379 = vmatprep.subr.mxu0 0.0
    %380 = vmatpush2.msra.mxu0 %v162
    %381 = vmatprep.subr.mxu0 0.0
    %382 = vmatpush2.msra.mxu0 %v161
    %383 = vmatprep.subr.mxu0 0.0
    %384 = vmatpush2.msra.mxu0 %v160
    %385 = vmatprep.subr.mxu0 0.0
    %386 = vmatpush2.msra.mxu0 %v159
    %387 = vmatprep.subr.mxu0 0.0
    %388 = vmatpush2.msra.mxu0 %v158
    %389 = vmatprep.subr.mxu0 0.0
    %390 = vmatpush2.msra.mxu0 %v157
    %391 = vmatprep.subr.mxu0 0.0
    %392 = vmatpush2.msra.mxu0 %v156
    %393 = vmatprep.subr.mxu0 0.0
    %394 = vmatpush2.msra.mxu0 %v155
    %395 = vmatprep.subr.mxu0 0.0
    %396 = vmatpush2.msra.mxu0 %v154
    %397 = vmatprep.subr.mxu0 0.0
    %398 = vmatpush2.msra.mxu0 %v153
    %399 = vmatprep.subr.mxu0 0.0
    %400 = vmatpush2.msra.mxu0 %v152
    %401 = vmatprep.subr.mxu0 0.0
    %402 = vmatpush2.msra.mxu0 %v151
    %403 = vmatprep.subr.mxu0 0.0
    %404 = vmatpush2.msra.mxu0 %v150
    %405 = vmatprep.mubr.f32.mxu0 %v61
    %406 = vmatmul.mubr.f32.gmra.mxu0 %v60
    %v407 = vpop.f32.mrf.mxu0
    %v408 = vadd.f32 %v333, %v407
    %v409 = vpop.f32.mrf.mxu0
    %410 = vmatprep.mubr.f32.mxu0 %v68
    %411 = vmatmul.mubr.f32.gmra.mxu0 %v67
    %v412 = vpop.f32.mrf.mxu0
    %v413 = vadd.f32 %v338, %v412
    %v414 = vpop.f32.mrf.mxu0
    %415 = vdwg.mxu0
    %416 = vmatprep.subr.mxu0 0.0
    %417 = vmatpush1.msra.mxu0 0.0
    %418 = vmatprep.subr.mxu0 0.0
    %419 = vmatpush1.msra.mxu0 0.0
    %420 = vmatprep.subr.mxu0 0.0
    %421 = vmatpush1.msra.mxu0 0.0
    %422 = vmatprep.subr.mxu0 0.0
    %423 = vmatpush1.msra.mxu0 0.0
    %424 = vmatprep.subr.mxu0 0.0
    %425 = vmatpush1.msra.mxu0 0.0
    %426 = vmatprep.subr.mxu0 0.0
    %427 = vmatpush1.msra.mxu0 %v176
    %428 = vmatprep.subr.mxu0 0.0
    %429 = vmatpush1.msra.mxu0 %v175
    %430 = vmatprep.subr.mxu0 0.0
    %431 = vmatpush1.msra.mxu0 %v174
    %432 = vmatprep.subr.mxu0 0.0
    %433 = vmatpush1.msra.mxu0 %v173
    %434 = vmatprep.subr.mxu0 0.0
    %435 = vmatpush1.msra.mxu0 %v172
    %436 = vmatprep.subr.mxu0 0.0
    %437 = vmatpush1.msra.mxu0 %v171
    %438 = vmatprep.subr.mxu0 0.0
    %439 = vmatpush1.msra.mxu0 %v170
    %440 = vmatprep.subr.mxu0 0.0
    %441 = vmatpush1.msra.mxu0 %v169
    %442 = vmatprep.subr.mxu0 0.0
    %443 = vmatpush1.msra.mxu0 %v168
    %444 = vmatprep.subr.mxu0 0.0
    %445 = vmatpush1.msra.mxu0 %v167
    %446 = vmatprep.subr.mxu0 0.0
    %447 = vmatpush1.msra.mxu0 %v166
    %448 = vmatprep.subr.mxu0 0.0
    %449 = vmatpush2.msra.mxu0 0.0
    %450 = vmatprep.subr.mxu0 0.0
    %451 = vmatpush2.msra.mxu0 0.0
    %452 = vmatprep.subr.mxu0 0.0
    %453 = vmatpush2.msra.mxu0 0.0
    %454 = vmatprep.subr.mxu0 0.0
    %455 = vmatpush2.msra.mxu0 0.0
    %456 = vmatprep.subr.mxu0 0.0
    %457 = vmatpush2.msra.mxu0 0.0
    %458 = vmatprep.subr.mxu0 0.0
    %459 = vmatpush2.msra.mxu0 0.0
    %460 = vmatprep.subr.mxu0 0.0
    %461 = vmatpush2.msra.mxu0 0.0
    %462 = vmatprep.subr.mxu0 0.0
    %463 = vmatpush2.msra.mxu0 0.0
    %464 = vmatprep.subr.mxu0 0.0
    %465 = vmatpush2.msra.mxu0 0.0
    %466 = vmatprep.subr.mxu0 0.0
    %467 = vmatpush2.msra.mxu0 0.0
    %468 = vmatprep.subr.mxu0 0.0
    %469 = vmatpush2.msra.mxu0 0.0
    %470 = vmatprep.subr.mxu0 0.0
    %471 = vmatpush2.msra.mxu0 0.0
    %472 = vmatprep.subr.mxu0 0.0
    %473 = vmatpush2.msra.mxu0 0.0
    %474 = vmatprep.subr.mxu0 0.0
    %475 = vmatpush2.msra.mxu0 0.0
    %476 = vmatprep.subr.mxu0 0.0
    %477 = vmatpush2.msra.mxu0 0.0
    %478 = vmatprep.subr.mxu0 0.0
    %479 = vmatpush2.msra.mxu0 0.0
    %480 = vmatprep.mubr.f32.mxu0 0.0
    %481 = vmatmul.mubr.f32.gmra.mxu0 %v186
    %v482 = vpop.f32.mrf.mxu0
    %v483 = vadd.f32 %v408, %v482
    %v484 = vpop.f32.mrf.mxu0
    %485 = vmatprep.mubr.f32.mxu0 0.0
    %486 = vmatmul.mubr.f32.gmra.mxu0 %v189
    %v487 = vpop.f32.mrf.mxu0
    %v488 = vadd.f32 %v413, %v487
    %v489 = vpop.f32.mrf.mxu0
    %490 = vdwg.mxu0
    %v491 = vld [vmem:[%s2] sm:$0xff]
    %v492 = vld [vmem:[%s2 + $0x8] sm:$0xff]
    %v493 = vld [vmem:[%s2 + $0x10] sm:$0xff]
    %v494 = vld [vmem:[%s2 + $0x18] sm:$0xff]
    %v495 = vld [vmem:[%s6] sm:$0xff]
    %v496 = vld [vmem:[%s6 + $0x8] sm:$0xff]
    %v497 = vld [vmem:[%s6 + $0x10] sm:$0xff]
    %v498 = vld [vmem:[%s6 + $0x18] sm:$0xff]
    %v499 = vld [vmem:[%s6 + $0x20] sm:$0xff]
    %v500 = vld [vmem:[%s6 + $0x28] sm:$0xff]
    %v501 = vld [vmem:[%s6 + $0x30] sm:$0xff]
    %v502 = vld [vmem:[%s6 + $0x38] sm:$0xff]
    %v503 = vld [vmem:[%s6 + $0x40] sm:$0xff]
    %v504 = vld [vmem:[%s6 + $0x48] sm:$0xff]
    %v505 = vld [vmem:[%s6 + $0x50] sm:$0xff]
    %v506 = vld [vmem:[%s6 + $0x58] sm:$0xff]
    %v507 = vld [vmem:[%s6 + $0x60] sm:$0xff]
    %v508 = vld [vmem:[%s6 + $0x68] sm:$0xff]
    %v509 = vld [vmem:[%s6 + $0x70] sm:$0xff]
    %v510 = vld [vmem:[%s6 + $0x78] sm:$0xff]
    %v511 = vld [vmem:[%s6 + $0x80] sm:$0xff]
    %v512 = vld [vmem:[%s6 + $0x88] sm:$0xff]
    %v513 = vld [vmem:[%s6 + $0x90] sm:$0xff]
    %v514 = vld [vmem:[%s6 + $0x98] sm:$0xff]
    %v515 = vld [vmem:[%s6 + $0xa0] sm:$0xff]
    %v516 = vld [vmem:[%s6 + $0xa8] sm:$0xff]
    %v517 = vld [vmem:[%s6 + $0xb0] sm:$0xff]
    %v518 = vld [vmem:[%s6 + $0xb8] sm:$0xff]
    %v519 = vld [vmem:[%s6 + $0xc0] sm:$0xff]
    %v520 = vld [vmem:[%s6 + $0xc8] sm:$0xff]
    %v521 = vld [vmem:[%s6 + $0xd0] sm:$0xff]
    %v522 = vld [vmem:[%s6 + $0xd8] sm:$0xff]
    %v523 = vld [vmem:[%s6 + $0xe0] sm:$0xff]
    %v524 = vld [vmem:[%s6 + $0xe8] sm:$0xff]
    %v525 = vld [vmem:[%s6 + $0xf0] sm:$0xff]
    %v526 = vld [vmem:[%s6 + $0xf8] sm:$0xff]
    %v527 = vlaneseq
    %v528 = vand.u32 %v527, 127
    %vm529 = vcmp.ge.s32.totalorder %v528, 64
    %vm530 = vcmp.lt.s32.totalorder %v528, 96
    %vm531 = vmand %vm529, %vm530
    %v532 = vsel %vm531, 2.0, 1.0
    %v533 = vsel %vm531, -1.0, 0.0
    %v534 = vld [vmem:[%s4] sm:$0x3]
    %v535 = vld [vmem:[%s5] sm:$0x3]
    %v536 = vld [vmem:[%s7] sm:$0x1]
    %v538 = vlaneseq
    %v539 = vshrl.u32 %v538, 7
    %v540 = vsub.s32 0, %v539
    %v541 = vrot.slane %v536, %v540
    %vm543 = vcmask 261120
    %v545 = vsel %vm543, %v534, 0
    %547 = vmatprep.subr.mxu0 0.0
    %548 = vmatpush1.msra.mxu0 0.0
    %549 = vmatprep.subr.mxu0 0.0
    %550 = vmatpush1.msra.mxu0 0.0
    %551 = vmatprep.subr.mxu0 0.0
    %552 = vmatpush1.msra.mxu0 0.0
    %553 = vmatprep.subr.mxu0 0.0
    %554 = vmatpush1.msra.mxu0 0.0
    %555 = vmatprep.subr.mxu0 0.0
    %556 = vmatpush1.msra.mxu0 0.0
    %557 = vmatprep.subr.mxu0 0.0
    %558 = vmatpush1.msra.mxu0 0.0
    %559 = vmatprep.subr.mxu0 0.0
    %560 = vmatpush1.msra.mxu0 0.0
    %561 = vmatprep.subr.mxu0 0.0
    %562 = vmatpush1.msra.mxu0 0.0
    %563 = vmatprep.subr.mxu0 0.0
    %564 = vmatpush1.msra.mxu0 0.0
    %565 = vmatprep.subr.mxu0 0.0
    %566 = vmatpush1.msra.mxu0 0.0
    %567 = vmatprep.subr.mxu0 0.0
    %568 = vmatpush1.msra.mxu0 0.0
    %569 = vmatprep.subr.mxu0 0.0
    %570 = vmatpush1.msra.mxu0 0.0
    %571 = vmatprep.subr.mxu0 0.0
    %572 = vmatpush1.msra.mxu0 %v494
    %573 = vmatprep.subr.mxu0 0.0
    %574 = vmatpush1.msra.mxu0 %v493
    %575 = vmatprep.subr.mxu0 0.0
    %576 = vmatpush1.msra.mxu0 %v492
    %577 = vmatprep.subr.mxu0 0.0
    %578 = vmatpush1.msra.mxu0 %v491
    %579 = vmatprep.subr.mxu0 0.0
    %580 = vmatpush2.msra.mxu0 0.0
    %581 = vmatprep.subr.mxu0 0.0
    %582 = vmatpush2.msra.mxu0 0.0
    %583 = vmatprep.subr.mxu0 0.0
    %584 = vmatpush2.msra.mxu0 0.0
    %585 = vmatprep.subr.mxu0 0.0
    %586 = vmatpush2.msra.mxu0 0.0
    %587 = vmatprep.subr.mxu0 0.0
    %588 = vmatpush2.msra.mxu0 0.0
    %589 = vmatprep.subr.mxu0 0.0
    %590 = vmatpush2.msra.mxu0 0.0
    %591 = vmatprep.subr.mxu0 0.0
    %592 = vmatpush2.msra.mxu0 0.0
    %593 = vmatprep.subr.mxu0 0.0
    %594 = vmatpush2.msra.mxu0 0.0
    %595 = vmatprep.subr.mxu0 0.0
    %596 = vmatpush2.msra.mxu0 0.0
    %597 = vmatprep.subr.mxu0 0.0
    %598 = vmatpush2.msra.mxu0 0.0
    %599 = vmatprep.subr.mxu0 0.0
    %600 = vmatpush2.msra.mxu0 0.0
    %601 = vmatprep.subr.mxu0 0.0
    %602 = vmatpush2.msra.mxu0 0.0
    %603 = vmatprep.subr.mxu0 0.0
    %604 = vmatpush2.msra.mxu0 0.0
    %605 = vmatprep.subr.mxu0 0.0
    %606 = vmatpush2.msra.mxu0 0.0
    %607 = vmatprep.subr.mxu0 0.0
    %608 = vmatpush2.msra.mxu0 0.0
    %609 = vmatprep.subr.mxu0 0.0
    %610 = vmatpush2.msra.mxu0 0.0
    %611 = vmatprep.mubr.f32.mxu0 0.0
    %612 = vmatmul.mubr.f32.gmra.mxu0 %v545
    %v613 = vpop.f32.mrf.mxu0
    %v614 = vadd.f32 0.0, %v613
    %v615 = vpop.f32.mrf.mxu0
    %616 = vdwg.mxu0
    %v617 = vadd.f32 %v483, %v614
    %v618 = vmul.f32 %v617, %v532
    %v619 = vxor.u32 %v618, 2147483648
    %v620 = vmul.f32 %v619, 1.442695
    %v621 = vpow.pop %v620
    %v622 = vadd.f32 %v621, 1.0
    %v623 = vrcp.pop %v622
    %v624 = vmul.f32 1.0, %v623
    %v625 = vmul.f32 %v624, %v532
    %v626 = vadd.f32 %v625, %v533
    %628 = vrot.lane.b32.xlu0 %v535, 32
    %v629 = vpop.permute.xlu0 %628
    %v631 = vmul.f32 %v626, %v629
    %633 = vrot.lane.b32.xlu0 %v626, 64
    %v634 = vpop.permute.xlu0 %633
    %v636 = vmul.f32 %v626, %v634
    %638 = vrot.lane.b32.xlu0 %v636, 32
    %v639 = vpop.permute.xlu0 %638
    %v641 = vadd.f32 %v631, %v639
    %v642 = vtanh.pop %v641
    %644 = vrot.lane.b32.xlu0 %v642, 64
    %v645 = vpop.permute.xlu0 %644
    %v647 = vmul.f32 %v626, %v645
    %649 = vrot.lane.b32.xlu0 %v647, 32
    %v650 = vpop.permute.xlu0 %649
    %v651 = vsel %vm543, %v650, 0
    %653 = vmatprep.subr.mxu0 0.0
    %654 = vmatpush1.msra.mxu0 0.0
    %655 = vmatprep.subr.mxu0 0.0
    %656 = vmatpush1.msra.mxu0 0.0
    %657 = vmatprep.subr.mxu0 0.0
    %658 = vmatpush1.msra.mxu0 0.0
    %659 = vmatprep.subr.mxu0 0.0
    %660 = vmatpush1.msra.mxu0 0.0
    %661 = vmatprep.subr.mxu0 0.0
    %662 = vmatpush1.msra.mxu0 0.0
    %663 = vmatprep.subr.mxu0 0.0
    %664 = vmatpush1.msra.mxu0 0.0
    %665 = vmatprep.subr.mxu0 0.0
    %666 = vmatpush1.msra.mxu0 0.0
    %667 = vmatprep.subr.mxu0 0.0
    %668 = vmatpush1.msra.mxu0 0.0
    %669 = vmatprep.subr.mxu0 0.0
    %670 = vmatpush1.msra.mxu0 0.0
    %671 = vmatprep.subr.mxu0 0.0
    %672 = vmatpush1.msra.mxu0 0.0
    %673 = vmatprep.subr.mxu0 0.0
    %674 = vmatpush1.msra.mxu0 0.0
    %675 = vmatprep.subr.mxu0 0.0
    %676 = vmatpush1.msra.mxu0 0.0
    %677 = vmatprep.subr.mxu0 0.0
    %678 = vmatpush1.msra.mxu0 %v498
    %679 = vmatprep.subr.mxu0 0.0
    %680 = vmatpush1.msra.mxu0 %v497
    %681 = vmatprep.subr.mxu0 0.0
    %682 = vmatpush1.msra.mxu0 %v496
    %683 = vmatprep.subr.mxu0 0.0
    %684 = vmatpush1.msra.mxu0 %v495
    %685 = vmatprep.subr.mxu0 0.0
    %686 = vmatpush2.msra.mxu0 0.0
    %687 = vmatprep.subr.mxu0 0.0
    %688 = vmatpush2.msra.mxu0 0.0
    %689 = vmatprep.subr.mxu0 0.0
    %690 = vmatpush2.msra.mxu0 0.0
    %691 = vmatprep.subr.mxu0 0.0
    %692 = vmatpush2.msra.mxu0 0.0
    %693 = vmatprep.subr.mxu0 0.0
    %694 = vmatpush2.msra.mxu0 0.0
    %695 = vmatprep.subr.mxu0 0.0
    %696 = vmatpush2.msra.mxu0 0.0
    %697 = vmatprep.subr.mxu0 0.0
    %698 = vmatpush2.msra.mxu0 0.0
    %699 = vmatprep.subr.mxu0 0.0
    %700 = vmatpush2.msra.mxu0 0.0
    %701 = vmatprep.subr.mxu0 0.0
    %702 = vmatpush2.msra.mxu0 0.0
    %703 = vmatprep.subr.mxu0 0.0
    %704 = vmatpush2.msra.mxu0 0.0
    %705 = vmatprep.subr.mxu0 0.0
    %706 = vmatpush2.msra.mxu0 0.0
    %707 = vmatprep.subr.mxu0 0.0
    %708 = vmatpush2.msra.mxu0 0.0
    %709 = vmatprep.subr.mxu0 0.0
    %710 = vmatpush2.msra.mxu0 0.0
    %711 = vmatprep.subr.mxu0 0.0
    %712 = vmatpush2.msra.mxu0 0.0
    %713 = vmatprep.subr.mxu0 0.0
    %714 = vmatpush2.msra.mxu0 0.0
    %715 = vmatprep.subr.mxu0 0.0
    %716 = vmatpush2.msra.mxu0 0.0
    %717 = vmatprep.mubr.f32.mxu0 0.0
    %718 = vmatmul.mubr.f32.gmra.mxu0 %v651
    %v719 = vpop.f32.mrf.mxu0
    %v720 = vadd.f32 0.0, %v719
    %v721 = vpop.f32.mrf.mxu0
    %722 = vdwg.mxu0
    %v723 = vadd.f32 %v541, %v720
    %724 = vmatprep.subr.mxu0 0.0
    %725 = vmatpush1.msra.mxu0 0.0
    %726 = vmatprep.subr.mxu0 0.0
    %727 = vmatpush1.msra.mxu0 0.0
    %728 = vmatprep.subr.mxu0 0.0
    %729 = vmatpush1.msra.mxu0 0.0
    %730 = vmatprep.subr.mxu0 0.0
    %731 = vmatpush1.msra.mxu0 0.0
    %732 = vmatprep.subr.mxu0 0.0
    %733 = vmatpush1.msra.mxu0 0.0
    %734 = vmatprep.subr.mxu0 0.0
    %735 = vmatpush1.msra.mxu0 0.0
    %736 = vmatprep.subr.mxu0 0.0
    %737 = vmatpush1.msra.mxu0 0.0
    %738 = vmatprep.subr.mxu0 0.0
    %739 = vmatpush1.msra.mxu0 0.0
    %740 = vmatprep.subr.mxu0 0.0
    %741 = vmatpush1.msra.mxu0 0.0
    %742 = vmatprep.subr.mxu0 0.0
    %743 = vmatpush1.msra.mxu0 0.0
    %744 = vmatprep.subr.mxu0 0.0
    %745 = vmatpush1.msra.mxu0 0.0
    %746 = vmatprep.subr.mxu0 0.0
    %747 = vmatpush1.msra.mxu0 0.0
    %748 = vmatprep.subr.mxu0 0.0
    %749 = vmatpush1.msra.mxu0 %v494
    %750 = vmatprep.subr.mxu0 0.0
    %751 = vmatpush1.msra.mxu0 %v493
    %752 = vmatprep.subr.mxu0 0.0
    %753 = vmatpush1.msra.mxu0 %v492
    %754 = vmatprep.subr.mxu0 0.0
    %755 = vmatpush1.msra.mxu0 %v491
    %756 = vmatprep.subr.mxu0 0.0
    %757 = vmatpush2.msra.mxu0 0.0
    %758 = vmatprep.subr.mxu0 0.0
    %759 = vmatpush2.msra.mxu0 0.0
    %760 = vmatprep.subr.mxu0 0.0
    %761 = vmatpush2.msra.mxu0 0.0
    %762 = vmatprep.subr.mxu0 0.0
    %763 = vmatpush2.msra.mxu0 0.0
    %764 = vmatprep.subr.mxu0 0.0
    %765 = vmatpush2.msra.mxu0 0.0
    %766 = vmatprep.subr.mxu0 0.0
    %767 = vmatpush2.msra.mxu0 0.0
    %768 = vmatprep.subr.mxu0 0.0
    %769 = vmatpush2.msra.mxu0 0.0
    %770 = vmatprep.subr.mxu0 0.0
    %771 = vmatpush2.msra.mxu0 0.0
    %772 = vmatprep.subr.mxu0 0.0
    %773 = vmatpush2.msra.mxu0 0.0
    %774 = vmatprep.subr.mxu0 0.0
    %775 = vmatpush2.msra.mxu0 0.0
    %776 = vmatprep.subr.mxu0 0.0
    %777 = vmatpush2.msra.mxu0 0.0
    %778 = vmatprep.subr.mxu0 0.0
    %779 = vmatpush2.msra.mxu0 0.0
    %780 = vmatprep.subr.mxu0 0.0
    %781 = vmatpush2.msra.mxu0 0.0
    %782 = vmatprep.subr.mxu0 0.0
    %783 = vmatpush2.msra.mxu0 0.0
    %784 = vmatprep.subr.mxu0 0.0
    %785 = vmatpush2.msra.mxu0 0.0
    %786 = vmatprep.subr.mxu0 0.0
    %787 = vmatpush2.msra.mxu0 0.0
    %788 = vmatprep.mubr.f32.mxu0 0.0
    %789 = vmatmul.mubr.f32.gmra.mxu0 %v651
    %v790 = vpop.f32.mrf.mxu0
    %v791 = vadd.f32 0.0, %v790
    %v792 = vpop.f32.mrf.mxu0
    %793 = vdwg.mxu0
    %v795 = vrot.slane %v791, 6
    %v797 = vadd.f32 %v483, %v795
    %v798 = vmul.f32 %v797, %v532
    %v799 = vxor.u32 %v798, 2147483648
    %v800 = vmul.f32 %v799, 1.442695
    %v801 = vpow.pop %v800
    %v802 = vadd.f32 %v801, 1.0
    %v803 = vrcp.pop %v802
    %v804 = vmul.f32 1.0, %v803
    %v805 = vmul.f32 %v804, %v532
    %v806 = vadd.f32 %v805, %v533
    %v808 = vrot.slane %v641, 6
    %v810 = vmul.f32 %v806, %v808
    %812 = vrot.lane.b32.xlu0 %v806, 64
    %v813 = vpop.permute.xlu0 %812
    %v815 = vmul.f32 %v806, %v813
    %817 = vrot.lane.b32.xlu0 %v815, 32
    %v818 = vpop.permute.xlu0 %817
    %v820 = vadd.f32 %v810, %v818
    %v821 = vtanh.pop %v820
    %823 = vrot.lane.b32.xlu0 %v821, 64
    %v824 = vpop.permute.xlu0 %823
    %v826 = vmul.f32 %v806, %v824
    %v828 = vrot.slane %v826, 2
    %829 = vrot.lane.b32.xlu0 %v828, 32
    %v830 = vpop.permute.xlu0 %829
    %v831 = vsel %vm543, %v830, 0
    %833 = vmatprep.subr.mxu0 0.0
    %834 = vmatpush1.msra.mxu0 0.0
    %835 = vmatprep.subr.mxu0 0.0
    %836 = vmatpush1.msra.mxu0 0.0
    %837 = vmatprep.subr.mxu0 0.0
    %838 = vmatpush1.msra.mxu0 0.0
    %839 = vmatprep.subr.mxu0 0.0
    %840 = vmatpush1.msra.mxu0 0.0
    %841 = vmatprep.subr.mxu0 0.0
    %842 = vmatpush1.msra.mxu0 0.0
    %843 = vmatprep.subr.mxu0 0.0
    %844 = vmatpush1.msra.mxu0 0.0
    %845 = vmatprep.subr.mxu0 0.0
    %846 = vmatpush1.msra.mxu0 0.0
    %847 = vmatprep.subr.mxu0 0.0
    %848 = vmatpush1.msra.mxu0 0.0
    %849 = vmatprep.subr.mxu0 0.0
    %850 = vmatpush1.msra.mxu0 0.0
    %851 = vmatprep.subr.mxu0 0.0
    %852 = vmatpush1.msra.mxu0 0.0
    %853 = vmatprep.subr.mxu0 0.0
    %854 = vmatpush1.msra.mxu0 0.0
    %855 = vmatprep.subr.mxu0 0.0
    %856 = vmatpush1.msra.mxu0 0.0
    %857 = vmatprep.subr.mxu0 0.0
    %858 = vmatpush1.msra.mxu0 %v502
    %859 = vmatprep.subr.mxu0 0.0
    %860 = vmatpush1.msra.mxu0 %v501
    %861 = vmatprep.subr.mxu0 0.0
    %862 = vmatpush1.msra.mxu0 %v500
    %863 = vmatprep.subr.mxu0 0.0
    %864 = vmatpush1.msra.mxu0 %v499
    %865 = vmatprep.subr.mxu0 0.0
    %866 = vmatpush2.msra.mxu0 0.0
    %867 = vmatprep.subr.mxu0 0.0
    %868 = vmatpush2.msra.mxu0 0.0
    %869 = vmatprep.subr.mxu0 0.0
    %870 = vmatpush2.msra.mxu0 0.0
    %871 = vmatprep.subr.mxu0 0.0
    %872 = vmatpush2.msra.mxu0 0.0
    %873 = vmatprep.subr.mxu0 0.0
    %874 = vmatpush2.msra.mxu0 0.0
    %875 = vmatprep.subr.mxu0 0.0
    %876 = vmatpush2.msra.mxu0 0.0
    %877 = vmatprep.subr.mxu0 0.0
    %878 = vmatpush2.msra.mxu0 0.0
    %879 = vmatprep.subr.mxu0 0.0
    %880 = vmatpush2.msra.mxu0 0.0
    %881 = vmatprep.subr.mxu0 0.0
    %882 = vmatpush2.msra.mxu0 0.0
    %883 = vmatprep.subr.mxu0 0.0
    %884 = vmatpush2.msra.mxu0 0.0
    %885 = vmatprep.subr.mxu0 0.0
    %886 = vmatpush2.msra.mxu0 0.0
    %887 = vmatprep.subr.mxu0 0.0
    %888 = vmatpush2.msra.mxu0 0.0
    %889 = vmatprep.subr.mxu0 0.0
    %890 = vmatpush2.msra.mxu0 0.0
    %891 = vmatprep.subr.mxu0 0.0
    %892 = vmatpush2.msra.mxu0 0.0
    %893 = vmatprep.subr.mxu0 0.0
    %894 = vmatpush2.msra.mxu0 0.0
    %895 = vmatprep.subr.mxu0 0.0
    %896 = vmatpush2.msra.mxu0 0.0
    %897 = vmatprep.mubr.f32.mxu0 0.0
    %898 = vmatmul.mubr.f32.gmra.mxu0 %v831
    %v899 = vpop.f32.mrf.mxu0
    %v900 = vadd.f32 0.0, %v899
    %v901 = vpop.f32.mrf.mxu0
    %902 = vdwg.mxu0
    %v903 = vadd.f32 %v723, %v900
    %904 = vmatprep.subr.mxu0 0.0
    %905 = vmatpush1.msra.mxu0 0.0
    %906 = vmatprep.subr.mxu0 0.0
    %907 = vmatpush1.msra.mxu0 0.0
    %908 = vmatprep.subr.mxu0 0.0
    %909 = vmatpush1.msra.mxu0 0.0
    %910 = vmatprep.subr.mxu0 0.0
    %911 = vmatpush1.msra.mxu0 0.0
    %912 = vmatprep.subr.mxu0 0.0
    %913 = vmatpush1.msra.mxu0 0.0
    %914 = vmatprep.subr.mxu0 0.0
    %915 = vmatpush1.msra.mxu0 0.0
    %916 = vmatprep.subr.mxu0 0.0
    %917 = vmatpush1.msra.mxu0 0.0
    %918 = vmatprep.subr.mxu0 0.0
    %919 = vmatpush1.msra.mxu0 0.0
    %920 = vmatprep.subr.mxu0 0.0
    %921 = vmatpush1.msra.mxu0 0.0
    %922 = vmatprep.subr.mxu0 0.0
    %923 = vmatpush1.msra.mxu0 0.0
    %924 = vmatprep.subr.mxu0 0.0
    %925 = vmatpush1.msra.mxu0 0.0
    %926 = vmatprep.subr.mxu0 0.0
    %927 = vmatpush1.msra.mxu0 0.0
    %928 = vmatprep.subr.mxu0 0.0
    %929 = vmatpush1.msra.mxu0 %v494
    %930 = vmatprep.subr.mxu0 0.0
    %931 = vmatpush1.msra.mxu0 %v493
    %932 = vmatprep.subr.mxu0 0.0
    %933 = vmatpush1.msra.mxu0 %v492
    %934 = vmatprep.subr.mxu0 0.0
    %935 = vmatpush1.msra.mxu0 %v491
    %936 = vmatprep.subr.mxu0 0.0
    %937 = vmatpush2.msra.mxu0 0.0
    %938 = vmatprep.subr.mxu0 0.0
    %939 = vmatpush2.msra.mxu0 0.0
    %940 = vmatprep.subr.mxu0 0.0
    %941 = vmatpush2.msra.mxu0 0.0
    %942 = vmatprep.subr.mxu0 0.0
    %943 = vmatpush2.msra.mxu0 0.0
    %944 = vmatprep.subr.mxu0 0.0
    %945 = vmatpush2.msra.mxu0 0.0
    %946 = vmatprep.subr.mxu0 0.0
    %947 = vmatpush2.msra.mxu0 0.0
    %948 = vmatprep.subr.mxu0 0.0
    %949 = vmatpush2.msra.mxu0 0.0
    %950 = vmatprep.subr.mxu0 0.0
    %951 = vmatpush2.msra.mxu0 0.0
    %952 = vmatprep.subr.mxu0 0.0
    %953 = vmatpush2.msra.mxu0 0.0
    %954 = vmatprep.subr.mxu0 0.0
    %955 = vmatpush2.msra.mxu0 0.0
    %956 = vmatprep.subr.mxu0 0.0
    %957 = vmatpush2.msra.mxu0 0.0
    %958 = vmatprep.subr.mxu0 0.0
    %959 = vmatpush2.msra.mxu0 0.0
    %960 = vmatprep.subr.mxu0 0.0
    %961 = vmatpush2.msra.mxu0 0.0
    %962 = vmatprep.subr.mxu0 0.0
    %963 = vmatpush2.msra.mxu0 0.0
    %964 = vmatprep.subr.mxu0 0.0
    %965 = vmatpush2.msra.mxu0 0.0
    %966 = vmatprep.subr.mxu0 0.0
    %967 = vmatpush2.msra.mxu0 0.0
    %968 = vmatprep.mubr.f32.mxu0 0.0
    %969 = vmatmul.mubr.f32.gmra.mxu0 %v831
    %v970 = vpop.f32.mrf.mxu0
    %v971 = vadd.f32 0.0, %v970
    %v972 = vpop.f32.mrf.mxu0
    %973 = vdwg.mxu0
    %v975 = vrot.slane %v971, 4
    %v977 = vadd.f32 %v483, %v975
    %v978 = vmul.f32 %v977, %v532
    %v979 = vxor.u32 %v978, 2147483648
    %v980 = vmul.f32 %v979, 1.442695
    %v981 = vpow.pop %v980
    %v982 = vadd.f32 %v981, 1.0
    %v983 = vrcp.pop %v982
    %v984 = vmul.f32 1.0, %v983
    %v985 = vmul.f32 %v984, %v532
    %v986 = vadd.f32 %v985, %v533
    %v988 = vrot.slane %v820, 6
    %v990 = vmul.f32 %v986, %v988
    %992 = vrot.lane.b32.xlu0 %v986, 64
    %v993 = vpop.permute.xlu0 %992
    %v995 = vmul.f32 %v986, %v993
    %997 = vrot.lane.b32.xlu0 %v995, 32
    %v998 = vpop.permute.xlu0 %997
    %v1000 = vadd.f32 %v990, %v998
    %v1001 = vtanh.pop %v1000
    %1003 = vrot.lane.b32.xlu0 %v1001, 64
    %v1004 = vpop.permute.xlu0 %1003
    %v1006 = vmul.f32 %v986, %v1004
    %v1008 = vrot.slane %v1006, 4
    %1009 = vrot.lane.b32.xlu0 %v1008, 32
    %v1010 = vpop.permute.xlu0 %1009
    %v1011 = vsel %vm543, %v1010, 0
    %1013 = vmatprep.subr.mxu0 0.0
    %1014 = vmatpush1.msra.mxu0 0.0
    %1015 = vmatprep.subr.mxu0 0.0
    %1016 = vmatpush1.msra.mxu0 0.0
    %1017 = vmatprep.subr.mxu0 0.0
    %1018 = vmatpush1.msra.mxu0 0.0
    %1019 = vmatprep.subr.mxu0 0.0
    %1020 = vmatpush1.msra.mxu0 0.0
    %1021 = vmatprep.subr.mxu0 0.0
    %1022 = vmatpush1.msra.mxu0 0.0
    %1023 = vmatprep.subr.mxu0 0.0
    %1024 = vmatpush1.msra.mxu0 0.0
    %1025 = vmatprep.subr.mxu0 0.0
    %1026 = vmatpush1.msra.mxu0 0.0
    %1027 = vmatprep.subr.mxu0 0.0
    %1028 = vmatpush1.msra.mxu0 0.0
    %1029 = vmatprep.subr.mxu0 0.0
    %1030 = vmatpush1.msra.mxu0 0.0
    %1031 = vmatprep.subr.mxu0 0.0
    %1032 = vmatpush1.msra.mxu0 0.0
    %1033 = vmatprep.subr.mxu0 0.0
    %1034 = vmatpush1.msra.mxu0 0.0
    %1035 = vmatprep.subr.mxu0 0.0
    %1036 = vmatpush1.msra.mxu0 0.0
    %1037 = vmatprep.subr.mxu0 0.0
    %1038 = vmatpush1.msra.mxu0 %v506
    %1039 = vmatprep.subr.mxu0 0.0
    %1040 = vmatpush1.msra.mxu0 %v505
    %1041 = vmatprep.subr.mxu0 0.0
    %1042 = vmatpush1.msra.mxu0 %v504
    %1043 = vmatprep.subr.mxu0 0.0
    %1044 = vmatpush1.msra.mxu0 %v503
    %1045 = vmatprep.subr.mxu0 0.0
    %1046 = vmatpush2.msra.mxu0 0.0
    %1047 = vmatprep.subr.mxu0 0.0
    %1048 = vmatpush2.msra.mxu0 0.0
    %1049 = vmatprep.subr.mxu0 0.0
    %1050 = vmatpush2.msra.mxu0 0.0
    %1051 = vmatprep.subr.mxu0 0.0
    %1052 = vmatpush2.msra.mxu0 0.0
    %1053 = vmatprep.subr.mxu0 0.0
    %1054 = vmatpush2.msra.mxu0 0.0
    %1055 = vmatprep.subr.mxu0 0.0
    %1056 = vmatpush2.msra.mxu0 0.0
    %1057 = vmatprep.subr.mxu0 0.0
    %1058 = vmatpush2.msra.mxu0 0.0
    %1059 = vmatprep.subr.mxu0 0.0
    %1060 = vmatpush2.msra.mxu0 0.0
    %1061 = vmatprep.subr.mxu0 0.0
    %1062 = vmatpush2.msra.mxu0 0.0
    %1063 = vmatprep.subr.mxu0 0.0
    %1064 = vmatpush2.msra.mxu0 0.0
    %1065 = vmatprep.subr.mxu0 0.0
    %1066 = vmatpush2.msra.mxu0 0.0
    %1067 = vmatprep.subr.mxu0 0.0
    %1068 = vmatpush2.msra.mxu0 0.0
    %1069 = vmatprep.subr.mxu0 0.0
    %1070 = vmatpush2.msra.mxu0 0.0
    %1071 = vmatprep.subr.mxu0 0.0
    %1072 = vmatpush2.msra.mxu0 0.0
    %1073 = vmatprep.subr.mxu0 0.0
    %1074 = vmatpush2.msra.mxu0 0.0
    %1075 = vmatprep.subr.mxu0 0.0
    %1076 = vmatpush2.msra.mxu0 0.0
    %1077 = vmatprep.mubr.f32.mxu0 0.0
    %1078 = vmatmul.mubr.f32.gmra.mxu0 %v1011
    %v1079 = vpop.f32.mrf.mxu0
    %v1080 = vadd.f32 0.0, %v1079
    %v1081 = vpop.f32.mrf.mxu0
    %1082 = vdwg.mxu0
    %v1083 = vadd.f32 %v903, %v1080
    %1084 = vmatprep.subr.mxu0 0.0
    %1085 = vmatpush1.msra.mxu0 0.0
    %1086 = vmatprep.subr.mxu0 0.0
    %1087 = vmatpush1.msra.mxu0 0.0
    %1088 = vmatprep.subr.mxu0 0.0
    %1089 = vmatpush1.msra.mxu0 0.0
    %1090 = vmatprep.subr.mxu0 0.0
    %1091 = vmatpush1.msra.mxu0 0.0
    %1092 = vmatprep.subr.mxu0 0.0
    %1093 = vmatpush1.msra.mxu0 0.0
    %1094 = vmatprep.subr.mxu0 0.0
    %1095 = vmatpush1.msra.mxu0 0.0
    %1096 = vmatprep.subr.mxu0 0.0
    %1097 = vmatpush1.msra.mxu0 0.0
    %1098 = vmatprep.subr.mxu0 0.0
    %1099 = vmatpush1.msra.mxu0 0.0
    %1100 = vmatprep.subr.mxu0 0.0
    %1101 = vmatpush1.msra.mxu0 0.0
    %1102 = vmatprep.subr.mxu0 0.0
    %1103 = vmatpush1.msra.mxu0 0.0
    %1104 = vmatprep.subr.mxu0 0.0
    %1105 = vmatpush1.msra.mxu0 0.0
    %1106 = vmatprep.subr.mxu0 0.0
    %1107 = vmatpush1.msra.mxu0 0.0
    %1108 = vmatprep.subr.mxu0 0.0
    %1109 = vmatpush1.msra.mxu0 %v494
    %1110 = vmatprep.subr.mxu0 0.0
    %1111 = vmatpush1.msra.mxu0 %v493
    %1112 = vmatprep.subr.mxu0 0.0
    %1113 = vmatpush1.msra.mxu0 %v492
    %1114 = vmatprep.subr.mxu0 0.0
    %1115 = vmatpush1.msra.mxu0 %v491
    %1116 = vmatprep.subr.mxu0 0.0
    %1117 = vmatpush2.msra.mxu0 0.0
    %1118 = vmatprep.subr.mxu0 0.0
    %1119 = vmatpush2.msra.mxu0 0.0
    %1120 = vmatprep.subr.mxu0 0.0
    %1121 = vmatpush2.msra.mxu0 0.0
    %1122 = vmatprep.subr.mxu0 0.0
    %1123 = vmatpush2.msra.mxu0 0.0
    %1124 = vmatprep.subr.mxu0 0.0
    %1125 = vmatpush2.msra.mxu0 0.0
    %1126 = vmatprep.subr.mxu0 0.0
    %1127 = vmatpush2.msra.mxu0 0.0
    %1128 = vmatprep.subr.mxu0 0.0
    %1129 = vmatpush2.msra.mxu0 0.0
    %1130 = vmatprep.subr.mxu0 0.0
    %1131 = vmatpush2.msra.mxu0 0.0
    %1132 = vmatprep.subr.mxu0 0.0
    %1133 = vmatpush2.msra.mxu0 0.0
    %1134 = vmatprep.subr.mxu0 0.0
    %1135 = vmatpush2.msra.mxu0 0.0
    %1136 = vmatprep.subr.mxu0 0.0
    %1137 = vmatpush2.msra.mxu0 0.0
    %1138 = vmatprep.subr.mxu0 0.0
    %1139 = vmatpush2.msra.mxu0 0.0
    %1140 = vmatprep.subr.mxu0 0.0
    %1141 = vmatpush2.msra.mxu0 0.0
    %1142 = vmatprep.subr.mxu0 0.0
    %1143 = vmatpush2.msra.mxu0 0.0
    %1144 = vmatprep.subr.mxu0 0.0
    %1145 = vmatpush2.msra.mxu0 0.0
    %1146 = vmatprep.subr.mxu0 0.0
    %1147 = vmatpush2.msra.mxu0 0.0
    %1148 = vmatprep.mubr.f32.mxu0 0.0
    %1149 = vmatmul.mubr.f32.gmra.mxu0 %v1011
    %v1150 = vpop.f32.mrf.mxu0
    %v1151 = vadd.f32 0.0, %v1150
    %v1152 = vpop.f32.mrf.mxu0
    %1153 = vdwg.mxu0
    %v1155 = vrot.slane %v1151, 2
    %v1157 = vadd.f32 %v483, %v1155
    %v1158 = vmul.f32 %v1157, %v532
    %v1159 = vxor.u32 %v1158, 2147483648
    %v1160 = vmul.f32 %v1159, 1.442695
    %v1161 = vpow.pop %v1160
    %v1162 = vadd.f32 %v1161, 1.0
    %v1163 = vrcp.pop %v1162
    %v1164 = vmul.f32 1.0, %v1163
    %v1165 = vmul.f32 %v1164, %v532
    %v1166 = vadd.f32 %v1165, %v533
    %v1168 = vrot.slane %v1000, 6
    %v1170 = vmul.f32 %v1166, %v1168
    %1172 = vrot.lane.b32.xlu0 %v1166, 64
    %v1173 = vpop.permute.xlu0 %1172
    %v1175 = vmul.f32 %v1166, %v1173
    %1177 = vrot.lane.b32.xlu0 %v1175, 32
    %v1178 = vpop.permute.xlu0 %1177
    %v1180 = vadd.f32 %v1170, %v1178
    %v1181 = vtanh.pop %v1180
    %1183 = vrot.lane.b32.xlu0 %v1181, 64
    %v1184 = vpop.permute.xlu0 %1183
    %v1186 = vmul.f32 %v1166, %v1184
    %v1188 = vrot.slane %v1186, 6
    %1189 = vrot.lane.b32.xlu0 %v1188, 32
    %v1190 = vpop.permute.xlu0 %1189
    %v1191 = vsel %vm543, %v1190, 0
    %1193 = vmatprep.subr.mxu0 0.0
    %1194 = vmatpush1.msra.mxu0 0.0
    %1195 = vmatprep.subr.mxu0 0.0
    %1196 = vmatpush1.msra.mxu0 0.0
    %1197 = vmatprep.subr.mxu0 0.0
    %1198 = vmatpush1.msra.mxu0 0.0
    %1199 = vmatprep.subr.mxu0 0.0
    %1200 = vmatpush1.msra.mxu0 0.0
    %1201 = vmatprep.subr.mxu0 0.0
    %1202 = vmatpush1.msra.mxu0 0.0
    %1203 = vmatprep.subr.mxu0 0.0
    %1204 = vmatpush1.msra.mxu0 0.0
    %1205 = vmatprep.subr.mxu0 0.0
    %1206 = vmatpush1.msra.mxu0 0.0
    %1207 = vmatprep.subr.mxu0 0.0
    %1208 = vmatpush1.msra.mxu0 0.0
    %1209 = vmatprep.subr.mxu0 0.0
    %1210 = vmatpush1.msra.mxu0 0.0
    %1211 = vmatprep.subr.mxu0 0.0
    %1212 = vmatpush1.msra.mxu0 0.0
    %1213 = vmatprep.subr.mxu0 0.0
    %1214 = vmatpush1.msra.mxu0 0.0
    %1215 = vmatprep.subr.mxu0 0.0
    %1216 = vmatpush1.msra.mxu0 0.0
    %1217 = vmatprep.subr.mxu0 0.0
    %1218 = vmatpush1.msra.mxu0 %v510
    %1219 = vmatprep.subr.mxu0 0.0
    %1220 = vmatpush1.msra.mxu0 %v509
    %1221 = vmatprep.subr.mxu0 0.0
    %1222 = vmatpush1.msra.mxu0 %v508
    %1223 = vmatprep.subr.mxu0 0.0
    %1224 = vmatpush1.msra.mxu0 %v507
    %1225 = vmatprep.subr.mxu0 0.0
    %1226 = vmatpush2.msra.mxu0 0.0
    %1227 = vmatprep.subr.mxu0 0.0
    %1228 = vmatpush2.msra.mxu0 0.0
    %1229 = vmatprep.subr.mxu0 0.0
    %1230 = vmatpush2.msra.mxu0 0.0
    %1231 = vmatprep.subr.mxu0 0.0
    %1232 = vmatpush2.msra.mxu0 0.0
    %1233 = vmatprep.subr.mxu0 0.0
    %1234 = vmatpush2.msra.mxu0 0.0
    %1235 = vmatprep.subr.mxu0 0.0
    %1236 = vmatpush2.msra.mxu0 0.0
    %1237 = vmatprep.subr.mxu0 0.0
    %1238 = vmatpush2.msra.mxu0 0.0
    %1239 = vmatprep.subr.mxu0 0.0
    %1240 = vmatpush2.msra.mxu0 0.0
    %1241 = vmatprep.subr.mxu0 0.0
    %1242 = vmatpush2.msra.mxu0 0.0
    %1243 = vmatprep.subr.mxu0 0.0
    %1244 = vmatpush2.msra.mxu0 0.0
    %1245 = vmatprep.subr.mxu0 0.0
    %1246 = vmatpush2.msra.mxu0 0.0
    %1247 = vmatprep.subr.mxu0 0.0
    %1248 = vmatpush2.msra.mxu0 0.0
    %1249 = vmatprep.subr.mxu0 0.0
    %1250 = vmatpush2.msra.mxu0 0.0
    %1251 = vmatprep.subr.mxu0 0.0
    %1252 = vmatpush2.msra.mxu0 0.0
    %1253 = vmatprep.subr.mxu0 0.0
    %1254 = vmatpush2.msra.mxu0 0.0
    %1255 = vmatprep.subr.mxu0 0.0
    %1256 = vmatpush2.msra.mxu0 0.0
    %1257 = vmatprep.mubr.f32.mxu0 0.0
    %1258 = vmatmul.mubr.f32.gmra.mxu0 %v1191
    %v1259 = vpop.f32.mrf.mxu0
    %v1260 = vadd.f32 0.0, %v1259
    %v1261 = vpop.f32.mrf.mxu0
    %1262 = vdwg.mxu0
    %v1263 = vadd.f32 %v1083, %v1260
    %1264 = vmatprep.subr.mxu0 0.0
    %1265 = vmatpush1.msra.mxu0 0.0
    %1266 = vmatprep.subr.mxu0 0.0
    %1267 = vmatpush1.msra.mxu0 0.0
    %1268 = vmatprep.subr.mxu0 0.0
    %1269 = vmatpush1.msra.mxu0 0.0
    %1270 = vmatprep.subr.mxu0 0.0
    %1271 = vmatpush1.msra.mxu0 0.0
    %1272 = vmatprep.subr.mxu0 0.0
    %1273 = vmatpush1.msra.mxu0 0.0
    %1274 = vmatprep.subr.mxu0 0.0
    %1275 = vmatpush1.msra.mxu0 0.0
    %1276 = vmatprep.subr.mxu0 0.0
    %1277 = vmatpush1.msra.mxu0 0.0
    %1278 = vmatprep.subr.mxu0 0.0
    %1279 = vmatpush1.msra.mxu0 0.0
    %1280 = vmatprep.subr.mxu0 0.0
    %1281 = vmatpush1.msra.mxu0 0.0
    %1282 = vmatprep.subr.mxu0 0.0
    %1283 = vmatpush1.msra.mxu0 0.0
    %1284 = vmatprep.subr.mxu0 0.0
    %1285 = vmatpush1.msra.mxu0 0.0
    %1286 = vmatprep.subr.mxu0 0.0
    %1287 = vmatpush1.msra.mxu0 0.0
    %1288 = vmatprep.subr.mxu0 0.0
    %1289 = vmatpush1.msra.mxu0 %v494
    %1290 = vmatprep.subr.mxu0 0.0
    %1291 = vmatpush1.msra.mxu0 %v493
    %1292 = vmatprep.subr.mxu0 0.0
    %1293 = vmatpush1.msra.mxu0 %v492
    %1294 = vmatprep.subr.mxu0 0.0
    %1295 = vmatpush1.msra.mxu0 %v491
    %1296 = vmatprep.subr.mxu0 0.0
    %1297 = vmatpush2.msra.mxu0 0.0
    %1298 = vmatprep.subr.mxu0 0.0
    %1299 = vmatpush2.msra.mxu0 0.0
    %1300 = vmatprep.subr.mxu0 0.0
    %1301 = vmatpush2.msra.mxu0 0.0
    %1302 = vmatprep.subr.mxu0 0.0
    %1303 = vmatpush2.msra.mxu0 0.0
    %1304 = vmatprep.subr.mxu0 0.0
    %1305 = vmatpush2.msra.mxu0 0.0
    %1306 = vmatprep.subr.mxu0 0.0
    %1307 = vmatpush2.msra.mxu0 0.0
    %1308 = vmatprep.subr.mxu0 0.0
    %1309 = vmatpush2.msra.mxu0 0.0
    %1310 = vmatprep.subr.mxu0 0.0
    %1311 = vmatpush2.msra.mxu0 0.0
    %1312 = vmatprep.subr.mxu0 0.0
    %1313 = vmatpush2.msra.mxu0 0.0
    %1314 = vmatprep.subr.mxu0 0.0
    %1315 = vmatpush2.msra.mxu0 0.0
    %1316 = vmatprep.subr.mxu0 0.0
    %1317 = vmatpush2.msra.mxu0 0.0
    %1318 = vmatprep.subr.mxu0 0.0
    %1319 = vmatpush2.msra.mxu0 0.0
    %1320 = vmatprep.subr.mxu0 0.0
    %1321 = vmatpush2.msra.mxu0 0.0
    %1322 = vmatprep.subr.mxu0 0.0
    %1323 = vmatpush2.msra.mxu0 0.0
    %1324 = vmatprep.subr.mxu0 0.0
    %1325 = vmatpush2.msra.mxu0 0.0
    %1326 = vmatprep.subr.mxu0 0.0
    %1327 = vmatpush2.msra.mxu0 0.0
    %1328 = vmatprep.mubr.f32.mxu0 0.0
    %1329 = vmatmul.mubr.f32.gmra.mxu0 %v1191
    %v1330 = vpop.f32.mrf.mxu0
    %v1331 = vadd.f32 0.0, %v1330
    %v1332 = vpop.f32.mrf.mxu0
    %1333 = vdwg.mxu0
    %v1334 = vadd.f32 %v488, %v1331
    %v1335 = vmul.f32 %v1334, %v532
    %v1336 = vxor.u32 %v1335, 2147483648
    %v1337 = vmul.f32 %v1336, 1.442695
    %v1338 = vpow.pop %v1337
    %v1339 = vadd.f32 %v1338, 1.0
    %v1340 = vrcp.pop %v1339
    %v1341 = vmul.f32 1.0, %v1340
    %v1342 = vmul.f32 %v1341, %v532
    %v1343 = vadd.f32 %v1342, %v533
    %v1345 = vrot.slane %v1180, 6
    %v1347 = vmul.f32 %v1343, %v1345
    %1349 = vrot.lane.b32.xlu0 %v1343, 64
    %v1350 = vpop.permute.xlu0 %1349
    %v1352 = vmul.f32 %v1343, %v1350
    %1354 = vrot.lane.b32.xlu0 %v1352, 32
    %v1355 = vpop.permute.xlu0 %1354
    %v1357 = vadd.f32 %v1347, %v1355
    %v1358 = vtanh.pop %v1357
    %1360 = vrot.lane.b32.xlu0 %v1358, 64
    %v1361 = vpop.permute.xlu0 %1360
    %v1363 = vmul.f32 %v1343, %v1361
    %1365 = vrot.lane.b32.xlu0 %v1363, 32
    %v1366 = vpop.permute.xlu0 %1365
    %v1367 = vsel %vm543, %v1366, 0
    %1369 = vmatprep.subr.mxu0 0.0
    %1370 = vmatpush1.msra.mxu0 0.0
    %1371 = vmatprep.subr.mxu0 0.0
    %1372 = vmatpush1.msra.mxu0 0.0
    %1373 = vmatprep.subr.mxu0 0.0
    %1374 = vmatpush1.msra.mxu0 0.0
    %1375 = vmatprep.subr.mxu0 0.0
    %1376 = vmatpush1.msra.mxu0 0.0
    %1377 = vmatprep.subr.mxu0 0.0
    %1378 = vmatpush1.msra.mxu0 0.0
    %1379 = vmatprep.subr.mxu0 0.0
    %1380 = vmatpush1.msra.mxu0 0.0
    %1381 = vmatprep.subr.mxu0 0.0
    %1382 = vmatpush1.msra.mxu0 0.0
    %1383 = vmatprep.subr.mxu0 0.0
    %1384 = vmatpush1.msra.mxu0 0.0
    %1385 = vmatprep.subr.mxu0 0.0
    %1386 = vmatpush1.msra.mxu0 0.0
    %1387 = vmatprep.subr.mxu0 0.0
    %1388 = vmatpush1.msra.mxu0 0.0
    %1389 = vmatprep.subr.mxu0 0.0
    %1390 = vmatpush1.msra.mxu0 0.0
    %1391 = vmatprep.subr.mxu0 0.0
    %1392 = vmatpush1.msra.mxu0 0.0
    %1393 = vmatprep.subr.mxu0 0.0
    %1394 = vmatpush1.msra.mxu0 %v514
    %1395 = vmatprep.subr.mxu0 0.0
    %1396 = vmatpush1.msra.mxu0 %v513
    %1397 = vmatprep.subr.mxu0 0.0
    %1398 = vmatpush1.msra.mxu0 %v512
    %1399 = vmatprep.subr.mxu0 0.0
    %1400 = vmatpush1.msra.mxu0 %v511
    %1401 = vmatprep.subr.mxu0 0.0
    %1402 = vmatpush2.msra.mxu0 0.0
    %1403 = vmatprep.subr.mxu0 0.0
    %1404 = vmatpush2.msra.mxu0 0.0
    %1405 = vmatprep.subr.mxu0 0.0
    %1406 = vmatpush2.msra.mxu0 0.0
    %1407 = vmatprep.subr.mxu0 0.0
    %1408 = vmatpush2.msra.mxu0 0.0
    %1409 = vmatprep.subr.mxu0 0.0
    %1410 = vmatpush2.msra.mxu0 0.0
    %1411 = vmatprep.subr.mxu0 0.0
    %1412 = vmatpush2.msra.mxu0 0.0
    %1413 = vmatprep.subr.mxu0 0.0
    %1414 = vmatpush2.msra.mxu0 0.0
    %1415 = vmatprep.subr.mxu0 0.0
    %1416 = vmatpush2.msra.mxu0 0.0
    %1417 = vmatprep.subr.mxu0 0.0
    %1418 = vmatpush2.msra.mxu0 0.0
    %1419 = vmatprep.subr.mxu0 0.0
    %1420 = vmatpush2.msra.mxu0 0.0
    %1421 = vmatprep.subr.mxu0 0.0
    %1422 = vmatpush2.msra.mxu0 0.0
    %1423 = vmatprep.subr.mxu0 0.0
    %1424 = vmatpush2.msra.mxu0 0.0
    %1425 = vmatprep.subr.mxu0 0.0
    %1426 = vmatpush2.msra.mxu0 0.0
    %1427 = vmatprep.subr.mxu0 0.0
    %1428 = vmatpush2.msra.mxu0 0.0
    %1429 = vmatprep.subr.mxu0 0.0
    %1430 = vmatpush2.msra.mxu0 0.0
    %1431 = vmatprep.subr.mxu0 0.0
    %1432 = vmatpush2.msra.mxu0 0.0
    %1433 = vmatprep.mubr.f32.mxu0 0.0
    %1434 = vmatmul.mubr.f32.gmra.mxu0 %v1367
    %v1435 = vpop.f32.mrf.mxu0
    %v1436 = vadd.f32 0.0, %v1435
    %v1437 = vpop.f32.mrf.mxu0
    %1438 = vdwg.mxu0
    %v1439 = vadd.f32 %v1263, %v1436
    %1440 = vmatprep.subr.mxu0 0.0
    %1441 = vmatpush1.msra.mxu0 0.0
    %1442 = vmatprep.subr.mxu0 0.0
    %1443 = vmatpush1.msra.mxu0 0.0
    %1444 = vmatprep.subr.mxu0 0.0
    %1445 = vmatpush1.msra.mxu0 0.0
    %1446 = vmatprep.subr.mxu0 0.0
    %1447 = vmatpush1.msra.mxu0 0.0
    %1448 = vmatprep.subr.mxu0 0.0
    %1449 = vmatpush1.msra.mxu0 0.0
    %1450 = vmatprep.subr.mxu0 0.0
    %1451 = vmatpush1.msra.mxu0 0.0
    %1452 = vmatprep.subr.mxu0 0.0
    %1453 = vmatpush1.msra.mxu0 0.0
    %1454 = vmatprep.subr.mxu0 0.0
    %1455 = vmatpush1.msra.mxu0 0.0
    %1456 = vmatprep.subr.mxu0 0.0
    %1457 = vmatpush1.msra.mxu0 0.0
    %1458 = vmatprep.subr.mxu0 0.0
    %1459 = vmatpush1.msra.mxu0 0.0
    %1460 = vmatprep.subr.mxu0 0.0
    %1461 = vmatpush1.msra.mxu0 0.0
    %1462 = vmatprep.subr.mxu0 0.0
    %1463 = vmatpush1.msra.mxu0 0.0
    %1464 = vmatprep.subr.mxu0 0.0
    %1465 = vmatpush1.msra.mxu0 %v494
    %1466 = vmatprep.subr.mxu0 0.0
    %1467 = vmatpush1.msra.mxu0 %v493
    %1468 = vmatprep.subr.mxu0 0.0
    %1469 = vmatpush1.msra.mxu0 %v492
    %1470 = vmatprep.subr.mxu0 0.0
    %1471 = vmatpush1.msra.mxu0 %v491
    %1472 = vmatprep.subr.mxu0 0.0
    %1473 = vmatpush2.msra.mxu0 0.0
    %1474 = vmatprep.subr.mxu0 0.0
    %1475 = vmatpush2.msra.mxu0 0.0
    %1476 = vmatprep.subr.mxu0 0.0
    %1477 = vmatpush2.msra.mxu0 0.0
    %1478 = vmatprep.subr.mxu0 0.0
    %1479 = vmatpush2.msra.mxu0 0.0
    %1480 = vmatprep.subr.mxu0 0.0
    %1481 = vmatpush2.msra.mxu0 0.0
    %1482 = vmatprep.subr.mxu0 0.0
    %1483 = vmatpush2.msra.mxu0 0.0
    %1484 = vmatprep.subr.mxu0 0.0
    %1485 = vmatpush2.msra.mxu0 0.0
    %1486 = vmatprep.subr.mxu0 0.0
    %1487 = vmatpush2.msra.mxu0 0.0
    %1488 = vmatprep.subr.mxu0 0.0
    %1489 = vmatpush2.msra.mxu0 0.0
    %1490 = vmatprep.subr.mxu0 0.0
    %1491 = vmatpush2.msra.mxu0 0.0
    %1492 = vmatprep.subr.mxu0 0.0
    %1493 = vmatpush2.msra.mxu0 0.0
    %1494 = vmatprep.subr.mxu0 0.0
    %1495 = vmatpush2.msra.mxu0 0.0
    %1496 = vmatprep.subr.mxu0 0.0
    %1497 = vmatpush2.msra.mxu0 0.0
    %1498 = vmatprep.subr.mxu0 0.0
    %1499 = vmatpush2.msra.mxu0 0.0
    %1500 = vmatprep.subr.mxu0 0.0
    %1501 = vmatpush2.msra.mxu0 0.0
    %1502 = vmatprep.subr.mxu0 0.0
    %1503 = vmatpush2.msra.mxu0 0.0
    %1504 = vmatprep.mubr.f32.mxu0 0.0
    %1505 = vmatmul.mubr.f32.gmra.mxu0 %v1367
    %v1506 = vpop.f32.mrf.mxu0
    %v1507 = vadd.f32 0.0, %v1506
    %v1508 = vpop.f32.mrf.mxu0
    %1509 = vdwg.mxu0
    %v1511 = vrot.slane %v1507, 6
    %v1513 = vadd.f32 %v488, %v1511
    %v1514 = vmul.f32 %v1513, %v532
    %v1515 = vxor.u32 %v1514, 2147483648
    %v1516 = vmul.f32 %v1515, 1.442695
    %v1517 = vpow.pop %v1516
    %v1518 = vadd.f32 %v1517, 1.0
    %v1519 = vrcp.pop %v1518
    %v1520 = vmul.f32 1.0, %v1519
    %v1521 = vmul.f32 %v1520, %v532
    %v1522 = vadd.f32 %v1521, %v533
    %v1524 = vrot.slane %v1357, 6
    %v1526 = vmul.f32 %v1522, %v1524
    %1528 = vrot.lane.b32.xlu0 %v1522, 64
    %v1529 = vpop.permute.xlu0 %1528
    %v1531 = vmul.f32 %v1522, %v1529
    %1533 = vrot.lane.b32.xlu0 %v1531, 32
    %v1534 = vpop.permute.xlu0 %1533
    %v1536 = vadd.f32 %v1526, %v1534
    %v1537 = vtanh.pop %v1536
    %1539 = vrot.lane.b32.xlu0 %v1537, 64
    %v1540 = vpop.permute.xlu0 %1539
    %v1542 = vmul.f32 %v1522, %v1540
    %v1544 = vrot.slane %v1542, 2
    %1545 = vrot.lane.b32.xlu0 %v1544, 32
    %v1546 = vpop.permute.xlu0 %1545
    %v1547 = vsel %vm543, %v1546, 0
    %1549 = vmatprep.subr.mxu0 0.0
    %1550 = vmatpush1.msra.mxu0 0.0
    %1551 = vmatprep.subr.mxu0 0.0
    %1552 = vmatpush1.msra.mxu0 0.0
    %1553 = vmatprep.subr.mxu0 0.0
    %1554 = vmatpush1.msra.mxu0 0.0
    %1555 = vmatprep.subr.mxu0 0.0
    %1556 = vmatpush1.msra.mxu0 0.0
    %1557 = vmatprep.subr.mxu0 0.0
    %1558 = vmatpush1.msra.mxu0 0.0
    %1559 = vmatprep.subr.mxu0 0.0
    %1560 = vmatpush1.msra.mxu0 0.0
    %1561 = vmatprep.subr.mxu0 0.0
    %1562 = vmatpush1.msra.mxu0 0.0
    %1563 = vmatprep.subr.mxu0 0.0
    %1564 = vmatpush1.msra.mxu0 0.0
    %1565 = vmatprep.subr.mxu0 0.0
    %1566 = vmatpush1.msra.mxu0 0.0
    %1567 = vmatprep.subr.mxu0 0.0
    %1568 = vmatpush1.msra.mxu0 0.0
    %1569 = vmatprep.subr.mxu0 0.0
    %1570 = vmatpush1.msra.mxu0 0.0
    %1571 = vmatprep.subr.mxu0 0.0
    %1572 = vmatpush1.msra.mxu0 0.0
    %1573 = vmatprep.subr.mxu0 0.0
    %1574 = vmatpush1.msra.mxu0 %v518
    %1575 = vmatprep.subr.mxu0 0.0
    %1576 = vmatpush1.msra.mxu0 %v517
    %1577 = vmatprep.subr.mxu0 0.0
    %1578 = vmatpush1.msra.mxu0 %v516
    %1579 = vmatprep.subr.mxu0 0.0
    %1580 = vmatpush1.msra.mxu0 %v515
    %1581 = vmatprep.subr.mxu0 0.0
    %1582 = vmatpush2.msra.mxu0 0.0
    %1583 = vmatprep.subr.mxu0 0.0
    %1584 = vmatpush2.msra.mxu0 0.0
    %1585 = vmatprep.subr.mxu0 0.0
    %1586 = vmatpush2.msra.mxu0 0.0
    %1587 = vmatprep.subr.mxu0 0.0
    %1588 = vmatpush2.msra.mxu0 0.0
    %1589 = vmatprep.subr.mxu0 0.0
    %1590 = vmatpush2.msra.mxu0 0.0
    %1591 = vmatprep.subr.mxu0 0.0
    %1592 = vmatpush2.msra.mxu0 0.0
    %1593 = vmatprep.subr.mxu0 0.0
    %1594 = vmatpush2.msra.mxu0 0.0
    %1595 = vmatprep.subr.mxu0 0.0
    %1596 = vmatpush2.msra.mxu0 0.0
    %1597 = vmatprep.subr.mxu0 0.0
    %1598 = vmatpush2.msra.mxu0 0.0
    %1599 = vmatprep.subr.mxu0 0.0
    %1600 = vmatpush2.msra.mxu0 0.0
    %1601 = vmatprep.subr.mxu0 0.0
    %1602 = vmatpush2.msra.mxu0 0.0
    %1603 = vmatprep.subr.mxu0 0.0
    %1604 = vmatpush2.msra.mxu0 0.0
    %1605 = vmatprep.subr.mxu0 0.0
    %1606 = vmatpush2.msra.mxu0 0.0
    %1607 = vmatprep.subr.mxu0 0.0
    %1608 = vmatpush2.msra.mxu0 0.0
    %1609 = vmatprep.subr.mxu0 0.0
    %1610 = vmatpush2.msra.mxu0 0.0
    %1611 = vmatprep.subr.mxu0 0.0
    %1612 = vmatpush2.msra.mxu0 0.0
    %1613 = vmatprep.mubr.f32.mxu0 0.0
    %1614 = vmatmul.mubr.f32.gmra.mxu0 %v1547
    %v1615 = vpop.f32.mrf.mxu0
    %v1616 = vadd.f32 0.0, %v1615
    %v1617 = vpop.f32.mrf.mxu0
    %1618 = vdwg.mxu0
    %v1619 = vadd.f32 %v1439, %v1616
    %1620 = vmatprep.subr.mxu0 0.0
    %1621 = vmatpush1.msra.mxu0 0.0
    %1622 = vmatprep.subr.mxu0 0.0
    %1623 = vmatpush1.msra.mxu0 0.0
    %1624 = vmatprep.subr.mxu0 0.0
    %1625 = vmatpush1.msra.mxu0 0.0
    %1626 = vmatprep.subr.mxu0 0.0
    %1627 = vmatpush1.msra.mxu0 0.0
    %1628 = vmatprep.subr.mxu0 0.0
    %1629 = vmatpush1.msra.mxu0 0.0
    %1630 = vmatprep.subr.mxu0 0.0
    %1631 = vmatpush1.msra.mxu0 0.0
    %1632 = vmatprep.subr.mxu0 0.0
    %1633 = vmatpush1.msra.mxu0 0.0
    %1634 = vmatprep.subr.mxu0 0.0
    %1635 = vmatpush1.msra.mxu0 0.0
    %1636 = vmatprep.subr.mxu0 0.0
    %1637 = vmatpush1.msra.mxu0 0.0
    %1638 = vmatprep.subr.mxu0 0.0
    %1639 = vmatpush1.msra.mxu0 0.0
    %1640 = vmatprep.subr.mxu0 0.0
    %1641 = vmatpush1.msra.mxu0 0.0
    %1642 = vmatprep.subr.mxu0 0.0
    %1643 = vmatpush1.msra.mxu0 0.0
    %1644 = vmatprep.subr.mxu0 0.0
    %1645 = vmatpush1.msra.mxu0 %v494
    %1646 = vmatprep.subr.mxu0 0.0
    %1647 = vmatpush1.msra.mxu0 %v493
    %1648 = vmatprep.subr.mxu0 0.0
    %1649 = vmatpush1.msra.mxu0 %v492
    %1650 = vmatprep.subr.mxu0 0.0
    %1651 = vmatpush1.msra.mxu0 %v491
    %1652 = vmatprep.subr.mxu0 0.0
    %1653 = vmatpush2.msra.mxu0 0.0
    %1654 = vmatprep.subr.mxu0 0.0
    %1655 = vmatpush2.msra.mxu0 0.0
    %1656 = vmatprep.subr.mxu0 0.0
    %1657 = vmatpush2.msra.mxu0 0.0
    %1658 = vmatprep.subr.mxu0 0.0
    %1659 = vmatpush2.msra.mxu0 0.0
    %1660 = vmatprep.subr.mxu0 0.0
    %1661 = vmatpush2.msra.mxu0 0.0
    %1662 = vmatprep.subr.mxu0 0.0
    %1663 = vmatpush2.msra.mxu0 0.0
    %1664 = vmatprep.subr.mxu0 0.0
    %1665 = vmatpush2.msra.mxu0 0.0
    %1666 = vmatprep.subr.mxu0 0.0
    %1667 = vmatpush2.msra.mxu0 0.0
    %1668 = vmatprep.subr.mxu0 0.0
    %1669 = vmatpush2.msra.mxu0 0.0
    %1670 = vmatprep.subr.mxu0 0.0
    %1671 = vmatpush2.msra.mxu0 0.0
    %1672 = vmatprep.subr.mxu0 0.0
    %1673 = vmatpush2.msra.mxu0 0.0
    %1674 = vmatprep.subr.mxu0 0.0
    %1675 = vmatpush2.msra.mxu0 0.0
    %1676 = vmatprep.subr.mxu0 0.0
    %1677 = vmatpush2.msra.mxu0 0.0
    %1678 = vmatprep.subr.mxu0 0.0
    %1679 = vmatpush2.msra.mxu0 0.0
    %1680 = vmatprep.subr.mxu0 0.0
    %1681 = vmatpush2.msra.mxu0 0.0
    %1682 = vmatprep.subr.mxu0 0.0
    %1683 = vmatpush2.msra.mxu0 0.0
    %1684 = vmatprep.mubr.f32.mxu0 0.0
    %1685 = vmatmul.mubr.f32.gmra.mxu0 %v1547
    %v1686 = vpop.f32.mrf.mxu0
    %v1687 = vadd.f32 0.0, %v1686
    %v1688 = vpop.f32.mrf.mxu0
    %1689 = vdwg.mxu0
    %v1691 = vrot.slane %v1687, 4
    %v1693 = vadd.f32 %v488, %v1691
    %v1694 = vmul.f32 %v1693, %v532
    %v1695 = vxor.u32 %v1694, 2147483648
    %v1696 = vmul.f32 %v1695, 1.442695
    %v1697 = vpow.pop %v1696
    %v1698 = vadd.f32 %v1697, 1.0
    %v1699 = vrcp.pop %v1698
    %v1700 = vmul.f32 1.0, %v1699
    %v1701 = vmul.f32 %v1700, %v532
    %v1702 = vadd.f32 %v1701, %v533
    %v1704 = vrot.slane %v1536, 6
    %v1706 = vmul.f32 %v1702, %v1704
    %1708 = vrot.lane.b32.xlu0 %v1702, 64
    %v1709 = vpop.permute.xlu0 %1708
    %v1711 = vmul.f32 %v1702, %v1709
    %1713 = vrot.lane.b32.xlu0 %v1711, 32
    %v1714 = vpop.permute.xlu0 %1713
    %v1716 = vadd.f32 %v1706, %v1714
    %v1717 = vtanh.pop %v1716
    %1719 = vrot.lane.b32.xlu0 %v1717, 64
    %v1720 = vpop.permute.xlu0 %1719
    %v1722 = vmul.f32 %v1702, %v1720
    %v1724 = vrot.slane %v1722, 4
    %1725 = vrot.lane.b32.xlu0 %v1724, 32
    %v1726 = vpop.permute.xlu0 %1725
    %v1727 = vsel %vm543, %v1726, 0
    %1729 = vmatprep.subr.mxu0 0.0
    %1730 = vmatpush1.msra.mxu0 0.0
    %1731 = vmatprep.subr.mxu0 0.0
    %1732 = vmatpush1.msra.mxu0 0.0
    %1733 = vmatprep.subr.mxu0 0.0
    %1734 = vmatpush1.msra.mxu0 0.0
    %1735 = vmatprep.subr.mxu0 0.0
    %1736 = vmatpush1.msra.mxu0 0.0
    %1737 = vmatprep.subr.mxu0 0.0
    %1738 = vmatpush1.msra.mxu0 0.0
    %1739 = vmatprep.subr.mxu0 0.0
    %1740 = vmatpush1.msra.mxu0 0.0
    %1741 = vmatprep.subr.mxu0 0.0
    %1742 = vmatpush1.msra.mxu0 0.0
    %1743 = vmatprep.subr.mxu0 0.0
    %1744 = vmatpush1.msra.mxu0 0.0
    %1745 = vmatprep.subr.mxu0 0.0
    %1746 = vmatpush1.msra.mxu0 0.0
    %1747 = vmatprep.subr.mxu0 0.0
    %1748 = vmatpush1.msra.mxu0 0.0
    %1749 = vmatprep.subr.mxu0 0.0
    %1750 = vmatpush1.msra.mxu0 0.0
    %1751 = vmatprep.subr.mxu0 0.0
    %1752 = vmatpush1.msra.mxu0 0.0
    %1753 = vmatprep.subr.mxu0 0.0
    %1754 = vmatpush1.msra.mxu0 %v522
    %1755 = vmatprep.subr.mxu0 0.0
    %1756 = vmatpush1.msra.mxu0 %v521
    %1757 = vmatprep.subr.mxu0 0.0
    %1758 = vmatpush1.msra.mxu0 %v520
    %1759 = vmatprep.subr.mxu0 0.0
    %1760 = vmatpush1.msra.mxu0 %v519
    %1761 = vmatprep.subr.mxu0 0.0
    %1762 = vmatpush2.msra.mxu0 0.0
    %1763 = vmatprep.subr.mxu0 0.0
    %1764 = vmatpush2.msra.mxu0 0.0
    %1765 = vmatprep.subr.mxu0 0.0
    %1766 = vmatpush2.msra.mxu0 0.0
    %1767 = vmatprep.subr.mxu0 0.0
    %1768 = vmatpush2.msra.mxu0 0.0
    %1769 = vmatprep.subr.mxu0 0.0
    %1770 = vmatpush2.msra.mxu0 0.0
    %1771 = vmatprep.subr.mxu0 0.0
    %1772 = vmatpush2.msra.mxu0 0.0
    %1773 = vmatprep.subr.mxu0 0.0
    %1774 = vmatpush2.msra.mxu0 0.0
    %1775 = vmatprep.subr.mxu0 0.0
    %1776 = vmatpush2.msra.mxu0 0.0
    %1777 = vmatprep.subr.mxu0 0.0
    %1778 = vmatpush2.msra.mxu0 0.0
    %1779 = vmatprep.subr.mxu0 0.0
    %1780 = vmatpush2.msra.mxu0 0.0
    %1781 = vmatprep.subr.mxu0 0.0
    %1782 = vmatpush2.msra.mxu0 0.0
    %1783 = vmatprep.subr.mxu0 0.0
    %1784 = vmatpush2.msra.mxu0 0.0
    %1785 = vmatprep.subr.mxu0 0.0
    %1786 = vmatpush2.msra.mxu0 0.0
    %1787 = vmatprep.subr.mxu0 0.0
    %1788 = vmatpush2.msra.mxu0 0.0
    %1789 = vmatprep.subr.mxu0 0.0
    %1790 = vmatpush2.msra.mxu0 0.0
    %1791 = vmatprep.subr.mxu0 0.0
    %1792 = vmatpush2.msra.mxu0 0.0
    %1793 = vmatprep.mubr.f32.mxu0 0.0
    %1794 = vmatmul.mubr.f32.gmra.mxu0 %v1727
    %v1795 = vpop.f32.mrf.mxu0
    %v1796 = vadd.f32 0.0, %v1795
    %v1797 = vpop.f32.mrf.mxu0
    %1798 = vdwg.mxu0
    %v1799 = vadd.f32 %v1619, %v1796
    %1800 = vmatprep.subr.mxu0 0.0
    %1801 = vmatpush1.msra.mxu0 0.0
    %1802 = vmatprep.subr.mxu0 0.0
    %1803 = vmatpush1.msra.mxu0 0.0
    %1804 = vmatprep.subr.mxu0 0.0
    %1805 = vmatpush1.msra.mxu0 0.0
    %1806 = vmatprep.subr.mxu0 0.0
    %1807 = vmatpush1.msra.mxu0 0.0
    %1808 = vmatprep.subr.mxu0 0.0
    %1809 = vmatpush1.msra.mxu0 0.0
    %1810 = vmatprep.subr.mxu0 0.0
    %1811 = vmatpush1.msra.mxu0 0.0
    %1812 = vmatprep.subr.mxu0 0.0
    %1813 = vmatpush1.msra.mxu0 0.0
    %1814 = vmatprep.subr.mxu0 0.0
    %1815 = vmatpush1.msra.mxu0 0.0
    %1816 = vmatprep.subr.mxu0 0.0
    %1817 = vmatpush1.msra.mxu0 0.0
    %1818 = vmatprep.subr.mxu0 0.0
    %1819 = vmatpush1.msra.mxu0 0.0
    %1820 = vmatprep.subr.mxu0 0.0
    %1821 = vmatpush1.msra.mxu0 0.0
    %1822 = vmatprep.subr.mxu0 0.0
    %1823 = vmatpush1.msra.mxu0 0.0
    %1824 = vmatprep.subr.mxu0 0.0
    %1825 = vmatpush1.msra.mxu0 %v494
    %1826 = vmatprep.subr.mxu0 0.0
    %1827 = vmatpush1.msra.mxu0 %v493
    %1828 = vmatprep.subr.mxu0 0.0
    %1829 = vmatpush1.msra.mxu0 %v492
    %1830 = vmatprep.subr.mxu0 0.0
    %1831 = vmatpush1.msra.mxu0 %v491
    %1832 = vmatprep.subr.mxu0 0.0
    %1833 = vmatpush2.msra.mxu0 0.0
    %1834 = vmatprep.subr.mxu0 0.0
    %1835 = vmatpush2.msra.mxu0 0.0
    %1836 = vmatprep.subr.mxu0 0.0
    %1837 = vmatpush2.msra.mxu0 0.0
    %1838 = vmatprep.subr.mxu0 0.0
    %1839 = vmatpush2.msra.mxu0 0.0
    %1840 = vmatprep.subr.mxu0 0.0
    %1841 = vmatpush2.msra.mxu0 0.0
    %1842 = vmatprep.subr.mxu0 0.0
    %1843 = vmatpush2.msra.mxu0 0.0
    %1844 = vmatprep.subr.mxu0 0.0
    %1845 = vmatpush2.msra.mxu0 0.0
    %1846 = vmatprep.subr.mxu0 0.0
    %1847 = vmatpush2.msra.mxu0 0.0
    %1848 = vmatprep.subr.mxu0 0.0
    %1849 = vmatpush2.msra.mxu0 0.0
    %1850 = vmatprep.subr.mxu0 0.0
    %1851 = vmatpush2.msra.mxu0 0.0
    %1852 = vmatprep.subr.mxu0 0.0
    %1853 = vmatpush2.msra.mxu0 0.0
    %1854 = vmatprep.subr.mxu0 0.0
    %1855 = vmatpush2.msra.mxu0 0.0
    %1856 = vmatprep.subr.mxu0 0.0
    %1857 = vmatpush2.msra.mxu0 0.0
    %1858 = vmatprep.subr.mxu0 0.0
    %1859 = vmatpush2.msra.mxu0 0.0
    %1860 = vmatprep.subr.mxu0 0.0
    %1861 = vmatpush2.msra.mxu0 0.0
    %1862 = vmatprep.subr.mxu0 0.0
    %1863 = vmatpush2.msra.mxu0 0.0
    %1864 = vmatprep.mubr.f32.mxu0 0.0
    %1865 = vmatmul.mubr.f32.gmra.mxu0 %v1727
    %v1866 = vpop.f32.mrf.mxu0
    %v1867 = vadd.f32 0.0, %v1866
    %v1868 = vpop.f32.mrf.mxu0
    %1869 = vdwg.mxu0
    %v1871 = vrot.slane %v1867, 2
    %v1873 = vadd.f32 %v488, %v1871
    %v1874 = vmul.f32 %v1873, %v532
    %v1875 = vxor.u32 %v1874, 2147483648
    %v1876 = vmul.f32 %v1875, 1.442695
    %v1877 = vpow.pop %v1876
    %v1878 = vadd.f32 %v1877, 1.0
    %v1879 = vrcp.pop %v1878
    %v1880 = vmul.f32 1.0, %v1879
    %v1881 = vmul.f32 %v1880, %v532
    %v1882 = vadd.f32 %v1881, %v533
    %v1884 = vrot.slane %v1716, 6
    %v1886 = vmul.f32 %v1882, %v1884
    %1888 = vrot.lane.b32.xlu0 %v1882, 64
    %v1889 = vpop.permute.xlu0 %1888
    %v1891 = vmul.f32 %v1882, %v1889
    %1893 = vrot.lane.b32.xlu0 %v1891, 32
    %v1894 = vpop.permute.xlu0 %1893
    %v1896 = vadd.f32 %v1886, %v1894
    %v1897 = vtanh.pop %v1896
    %1899 = vrot.lane.b32.xlu0 %v1897, 64
    %v1900 = vpop.permute.xlu0 %1899
    %v1902 = vmul.f32 %v1882, %v1900
    %v1904 = vrot.slane %v1902, 6
    %1905 = vrot.lane.b32.xlu0 %v1904, 32
    %v1906 = vpop.permute.xlu0 %1905
    %v1907 = vsel %vm543, %v1906, 0
    %1909 = vmatprep.subr.mxu0 0.0
    %1910 = vmatpush1.msra.mxu0 0.0
    %1911 = vmatprep.subr.mxu0 0.0
    %1912 = vmatpush1.msra.mxu0 0.0
    %1913 = vmatprep.subr.mxu0 0.0
    %1914 = vmatpush1.msra.mxu0 0.0
    %1915 = vmatprep.subr.mxu0 0.0
    %1916 = vmatpush1.msra.mxu0 0.0
    %1917 = vmatprep.subr.mxu0 0.0
    %1918 = vmatpush1.msra.mxu0 0.0
    %1919 = vmatprep.subr.mxu0 0.0
    %1920 = vmatpush1.msra.mxu0 0.0
    %1921 = vmatprep.subr.mxu0 0.0
    %1922 = vmatpush1.msra.mxu0 0.0
    %1923 = vmatprep.subr.mxu0 0.0
    %1924 = vmatpush1.msra.mxu0 0.0
    %1925 = vmatprep.subr.mxu0 0.0
    %1926 = vmatpush1.msra.mxu0 0.0
    %1927 = vmatprep.subr.mxu0 0.0
    %1928 = vmatpush1.msra.mxu0 0.0
    %1929 = vmatprep.subr.mxu0 0.0
    %1930 = vmatpush1.msra.mxu0 0.0
    %1931 = vmatprep.subr.mxu0 0.0
    %1932 = vmatpush1.msra.mxu0 0.0
    %1933 = vmatprep.subr.mxu0 0.0
    %1934 = vmatpush1.msra.mxu0 %v526
    %1935 = vmatprep.subr.mxu0 0.0
    %1936 = vmatpush1.msra.mxu0 %v525
    %1937 = vmatprep.subr.mxu0 0.0
    %1938 = vmatpush1.msra.mxu0 %v524
    %1939 = vmatprep.subr.mxu0 0.0
    %1940 = vmatpush1.msra.mxu0 %v523
    %1941 = vmatprep.subr.mxu0 0.0
    %1942 = vmatpush2.msra.mxu0 0.0
    %1943 = vmatprep.subr.mxu0 0.0
    %1944 = vmatpush2.msra.mxu0 0.0
    %1945 = vmatprep.subr.mxu0 0.0
    %1946 = vmatpush2.msra.mxu0 0.0
    %1947 = vmatprep.subr.mxu0 0.0
    %1948 = vmatpush2.msra.mxu0 0.0
    %1949 = vmatprep.subr.mxu0 0.0
    %1950 = vmatpush2.msra.mxu0 0.0
    %1951 = vmatprep.subr.mxu0 0.0
    %1952 = vmatpush2.msra.mxu0 0.0
    %1953 = vmatprep.subr.mxu0 0.0
    %1954 = vmatpush2.msra.mxu0 0.0
    %1955 = vmatprep.subr.mxu0 0.0
    %1956 = vmatpush2.msra.mxu0 0.0
    %1957 = vmatprep.subr.mxu0 0.0
    %1958 = vmatpush2.msra.mxu0 0.0
    %1959 = vmatprep.subr.mxu0 0.0
    %1960 = vmatpush2.msra.mxu0 0.0
    %1961 = vmatprep.subr.mxu0 0.0
    %1962 = vmatpush2.msra.mxu0 0.0
    %1963 = vmatprep.subr.mxu0 0.0
    %1964 = vmatpush2.msra.mxu0 0.0
    %1965 = vmatprep.subr.mxu0 0.0
    %1966 = vmatpush2.msra.mxu0 0.0
    %1967 = vmatprep.subr.mxu0 0.0
    %1968 = vmatpush2.msra.mxu0 0.0
    %1969 = vmatprep.subr.mxu0 0.0
    %1970 = vmatpush2.msra.mxu0 0.0
    %1971 = vmatprep.subr.mxu0 0.0
    %1972 = vmatpush2.msra.mxu0 0.0
    %1973 = vmatprep.mubr.f32.mxu0 0.0
    %1974 = vmatmul.mubr.f32.gmra.mxu0 %v1907
    %v1975 = vpop.f32.mrf.mxu0
    %v1976 = vadd.f32 0.0, %v1975
    %v1977 = vpop.f32.mrf.mxu0
    %1978 = vdwg.mxu0
    %v1979 = vadd.f32 %v1799, %v1976
    %v1980 = vmax.f32 %v1979, 0.0
    %v1981 = vld [vmem:[%s8] sm:$0x1]
    %v1983 = vlaneseq
    %v1984 = vshrl.u32 %v1983, 7
    %v1985 = vsub.s32 0, %v1984
    %v1986 = vrot.slane %v1981, %v1985
    %v1988 = vmul.f32 %v1980, %v1986
    %vm1989 = vcmask 123904
    %v1990 = vsel %vm1989, %v1988, 0.0
    %1991 = vadd.xlane.f32.xlu0 %v1990
    %v1992 = vpop.xlane.xlu0 %1991
    %v1993 = vld [vmem:[#allocation2] sm:$0x1]
    %v1995 = vlaneseq
    %v1996 = vshrl.u32 %v1995, 7
    %v1997 = vsub.s32 0, %v1996
    %v1998 = vrot.slane %v1993, %v1997
    %v2000 = vadd.f32 %v1992, %v1998
    %vm2001 = vcmask 1024
    %2002 = vst.msk [vmem:[%s10] sm:$0x3] %vm2001, %v2000
    %2003 = vrot.lane.b32.xlu0 %v1902, 32
    %v2004 = vpop.permute.xlu0 %2003
    %vm2006 = vcmask 261126
    %2007 = vst.msk [vmem:[#allocation6 - $0x6] sm:$0xc0] %vm2006, %v2004
    %2009 = vrot.lane.b32.xlu0 %v1896, 96
    %v2010 = vpop.permute.xlu0 %2009
    %2012 = vst.msk [vmem:[#allocation7 - $0x6] sm:$0xc0] %vm2006, %v2010
    // Predicated region
    $region46: #{tpu_custom_call.1} parent=1 // pred_check
      _
    $region47: #{tpu_custom_call.1} parent=1 // pred_check_branch
      %2014 = sbr.rel (0) target = $region49
    $region48: #{tpu_custom_call.1} parent=1 // pred_region
      _
    $region49: #{tpu_custom_call.1} parent=1 // pred_fallthru
      _
    // Predicated region
    $region50: #{tpu_custom_call.1} parent=1 // pred_check
      _
    $region51: #{tpu_custom_call.1} parent=1 // pred_check_branch
      %2016 = sbr.rel (0) target = $region53
    $region52: #{tpu_custom_call.1} parent=1 // pred_region
      %s2018 = ssub.s32 32, 32
      %2019 = vsyncadd [#allocation5], %s2018
      %s2021 = sshll.u32 [#allocation6], 4
      %s2022 = int_to_ptr.vmem [resolvable:$true] %s2021
      %2024 = dma.vmem_to_hbm [thread:$0]  %s2022, 32, %s11, [#allocation5]
    $region53: #{tpu_custom_call.1} parent=1 // pred_fallthru
      _
    // Predicated region
    $region54: #{tpu_custom_call.1} parent=1 // pred_check
      _
    $region55: #{tpu_custom_call.1} parent=1 // pred_check_branch
      %2026 = sbr.rel (0) target = $region57
    $region56: #{tpu_custom_call.1} parent=1 // pred_region
      %s2028 = ssub.s32 32, 32
      %2029 = vsyncadd [#allocation8], %s2028
      %s2031 = sshll.u32 [#allocation7], 4
      %s2032 = int_to_ptr.vmem [resolvable:$true] %s2031
      %2034 = dma.vmem_to_hbm [thread:$0]  %s2032, 32, %s12, [#allocation8]
    $region57: #{tpu_custom_call.1} parent=1 // pred_fallthru
      _
    // Predicated region
    $region58: #{tpu_custom_call.1} parent=1 // pred_check
      _
    $region59: #{tpu_custom_call.1} parent=1 // pred_check_branch
      %2036 = sbr.rel (0) target = $region61
    $region60: #{tpu_custom_call.1} parent=1 // pred_region
      _
    $region61: #{tpu_custom_call.1} parent=1 // pred_fallthru
      _
    // Predicated region
    $region62: #{tpu_custom_call.1} parent=1 // pred_check
      _
    $region63: #{tpu_custom_call.1} parent=1 // pred_check_branch
      %2038 = sbr.rel (0) target = $region65
    $region64: #{tpu_custom_call.1} parent=1 // pred_region
      %2039 = dma.done [#allocation5], 32
    $region65: #{tpu_custom_call.1} parent=1 // pred_fallthru
      _
    // Predicated region
    $region66: #{tpu_custom_call.1} parent=1 // pred_check
      _
    $region67: #{tpu_custom_call.1} parent=1 // pred_check_branch
      %2041 = sbr.rel (0) target = $region69
    $region68: #{tpu_custom_call.1} parent=1 // pred_region
      %2042 = dma.done [#allocation8], 32
    $region69: #{tpu_custom_call.1} parent=1 // pred_fallthru
      _
    %2043 = vsyncpa [#allocation4], 1
    %2044 = vsyncpa [#allocation5], 1
    %2045 = vsyncpa [#allocation8], 1

</llo_original>
